<compile_context>
chip_gen: v5e
topology: v5e:2x2
jax: 0.10.0
libtpu: 0.0.40
codegen_flags: <defaults>
</compile_context>

<pallas_src>
import functools

import jax
import jax.numpy as jnp
from jax.experimental import pallas as pl
from jax.experimental.pallas import tpu as pltpu


SLAB_W = 128  # lane-dense packed output width (one full vreg lane tile)


# ---------------------------------------------------------------------------
# Fused Pallas kernel
# ---------------------------------------------------------------------------

def _mpanet_fused_kernel(x_ref, wt_ref, w1_ref, w2_ref, wh_ref, wvs_ref,
                         b_ref, out_ref, *, d):
    """Whole per-point pipeline for one row tile.

    Output slab columns (width SLAB_W = 128, bf16):
      [0:d)        point_features               (backbone feature head)
      [d:2d)       L2-normalized vote features  (feat + residual, normalized)
      [2d:2d+3)    vote offsets                 (seed xyz added in the wrapper)
      [2d+3:2d+5)  binary semantic logits
      [2d+5:2d+6)  objectness score
      [2d+6:2d+17) background semantic logits   (UnaryBlock, 11 classes)
      rest         zeros

    b_ref rows: 0 trunk bias, 1 heads bias, 2 conv1 bias, 3 conv2 bias,
    4 fused conv3+sem bias, 6 vote-feature norm mask, 7 LeakyReLU slope row.
    """
    f32 = jnp.float32
    b = b_ref[...]                  # (8, SLAB_W) packed rows, f32
    vmask = b[6:7, :]               # 1.0 on vote-feature cols [d, 2d), else 0
    leak = b[7:8, :]                # 0.1 on sem cols [2d+6, 2d+17), else 1.0

    def mm(a, w_ref):
        # bf16 operands on the MXU, f32 accumulation; bias adds / activations
        # stay on the f32 accumulator (native VPU path on every generation).
        return jnp.dot(a.astype(w_ref.dtype), w_ref[...],
                       preferred_element_type=f32)

    # Backbone stand-in trunk (kept f32: K = in_dim is tiny, preserves
    # coordinate-derived precision).
    # TODO(synk): KPFCNN (KPConv) source not provided; per-point MLP stand-in.
    h = jnp.maximum(mm(x_ref[...], wt_ref) + b[0:1, 0:d], 0.0)

    # Packed backbone heads: [feat | feat copy | 0 | bin | obj | 0...]
    slab = mm(h, wh_ref) + b[1:2, :]
    feat_b = slab[:, 0:d].astype(wh_ref.dtype)   # cast to bf16 once, reuse

    # VotingModule conv1/conv2 (+ReLU).
    # TODO(synk): BatchNorm folded to identity (fresh init); fold trained BN
    # scale/shift into w/b for numerical parity with the PyTorch model.
    v1 = jnp.maximum(mm(feat_b, w1_ref) + b[2:3, 0:d], 0.0)
    v2 = jnp.maximum(mm(v1, w2_ref) + b[3:4, 0:d], 0.0)

    # Single fused K=2d matmul: rows [0,d) of wvs consume feat (sem-background
    # UnaryBlock), rows [d,2d) consume v2 (VotingModule conv3 residual+offset).
    lhs = jnp.concatenate([feat_b, v2.astype(wvs_ref.dtype)], axis=-1)
    vs = mm(lhs, wvs_ref) + b[4:5, :]
    # Per-column LeakyReLU: slope row is 0.1 only on the sem columns, 1.0
    # elsewhere, so vote/offset columns pass through unchanged and the
    # zero-padded columns stay exactly zero.
    vs = jnp.where(vs >= 0.0, vs, vs * leak)

    slab = slab + vs                              # column-disjoint accumulate

    # Fused L2 normalization of the vote-feature columns via the mask row
    # (no iota / int compares / selects).  torch divides by the raw norm; the
    # 1e-12 only guards the exact zero vector.
    ssq = jnp.sum(slab * slab * vmask, axis=-1, keepdims=True)
    inv = jax.lax.rsqrt(ssq + 1e-12)
    slab = slab * (1.0 + vmask * (inv - 1.0))

    out_ref[...] = slab.astype(out_ref.dtype)


def _choose_tile(n, *, max_tile=2048, min_steps=4):
    """Row tile selection.

    Small clouds: one grid step (no forced split -- pure overhead on 1-TC
    v5e/v6e).  Large clouds: at least `min_steps` steps (>=2 per v7x
    TensorCore for DMA/compute overlap) with tiles up to 2048 rows to
    amortize the ~0.35 us fixed per-step overhead; prefer an 8-aligned tile
    that divides N exactly so no pad copy is needed.
    """
    n8 = ((n + 7) // 8) * 8
    if n8 <= max_tile:
        return n8
    tm = min(max_tile, ((n8 // min_steps + 7) // 8) * 8)
    tm = max(tm, 8)
    lo = max(8, ((tm * 3 // 4) // 8) * 8)
    for cand in range(tm, lo - 1, -8):
        if n % cand == 0:
            return cand
    return tm


def _run_fused(in_features, params, *, d, tm):
    n, in_dim = in_features.shape
    grid = pl.cdiv(n, tm)
    n_pad = grid * tm
    if n_pad != n:
        # TODO(synk): a masked last tile would avoid this (small) pad copy.
        in_features = jnp.pad(in_features, ((0, n_pad - n), (0, 0)))
    kern = functools.partial(_mpanet_fused_kernel, d=d)
    slab = pl.pallas_call(
        kern,
        out_shape=jax.ShapeDtypeStruct((n_pad, SLAB_W), jnp.bfloat16),
        grid_spec=pltpu.PrefetchScalarGridSpec(
            num_scalar_prefetch=0,
            grid=(grid,),
            in_specs=[
                pl.BlockSpec((tm, in_dim), lambda i: (i, 0)),
                pl.BlockSpec(params["w_trunk"].shape, lambda i: (0, 0)),
                pl.BlockSpec(params["w_v1"].shape, lambda i: (0, 0)),
                pl.BlockSpec(params["w_v2"].shape, lambda i: (0, 0)),
                pl.BlockSpec(params["w_heads"].shape, lambda i: (0, 0)),
                pl.BlockSpec(params["w_votesem"].shape, lambda i: (0, 0)),
                pl.BlockSpec(params["b_packed"].shape, lambda i: (0, 0)),
            ],
            out_specs=pl.BlockSpec((tm, SLAB_W), lambda i: (i, 0)),
        ),
        compiler_params=pltpu.CompilerParams(
            dimension_semantics=("parallel",),
            vmem_limit_bytes=32 * 1024 * 1024),
    )(in_features, params["w_trunk"], params["w_v1"], params["w_v2"],
      params["w_heads"], params["w_votesem"], params["b_packed"])
    return slab[:n]


@functools.partial(jax.jit, static_argnames=("d", "tm"))
def _point_pipeline(points, in_features, params, *, d, tm):
    """Fused per-point pipeline + cheap XLA unpacking of the packed slab."""
    slab = _run_fused(in_features.astype(jnp.float32), params, d=d, tm=tm)
    f32 = jnp.float32
    point_features_nd = slab[:, 0:d].astype(f32)
    vote_features_nd = slab[:, d:2 * d].astype(f32)
    vote_offsets = slab[:, 2 * d:2 * d + 3].astype(f32)
    point_semantic_classes_binary = slab[:, 2 * d + 3:2 * d + 5].astype(f32)
    point_objectness_scores = slab[:, 2 * d + 5:2 * d + 6].astype(f32)
    fp_points_sem_classes = slab[:, 2 * d + 6:2 * d + 17].astype(f32)
    votes_nd = points.astype(f32) + vote_offsets
    return (point_features_nd, vote_features_nd, votes_nd,
            point_semantic_classes_binary, point_objectness_scores,
            fp_points_sem_classes)


# ---------------------------------------------------------------------------
# Model wrapper
# ---------------------------------------------------------------------------

class MPAnetBinaryPallas:
    """Pallas re-implementation of MPAnetBinary.forward (inference path)."""

    def __init__(self, key, first_features_dim=32, in_dim=4, num_classes=8,
                 num_proposal=8, nsample=16, compute_dtype=jnp.bfloat16):
        D = self.D = first_features_dim
        self.in_dim = in_dim
        self.C = num_classes          # len(lbl_values) - len(ign_lbls)
        self.num_proposal = num_proposal
        self.nsample = nsample
        assert 2 * D + 17 <= SLAB_W, "slab packing assumes first_features_dim <= 55"

        def w(k, shape, scale=0.1):
            return scale * jax.random.normal(k, shape, jnp.float32)

        ks = jax.random.split(key, 18)
        # backbone stand-in (TODO(synk): KPFCNN not reproducible from source)
        w_trunk, b_trunk = w(ks[0], (in_dim, D)), w(ks[9], (D,), 0.02)
        w_bin, b_bin = w(ks[1], (D, 2)), w(ks[10], (2,), 0.02)
        w_obj, b_obj = w(ks[2], (D, 1)), w(ks[11], (1,), 0.02)
        w_feat, b_feat = w(ks[3], (D, D)), w(ks[12], (D,), 0.02)
        # VotingModule (vote_factor=1); BN folded to identity (fresh init)
        w_v1, b_v1 = w(ks[4], (D, D)), w(ks[13], (D,), 0.02)
        w_v2, b_v2 = w(ks[5], (D, D)), w(ks[14], (D,), 0.02)
        w_off, b_off = w(ks[6], (D, 3)), w(ks[15], (3,), 0.02)
        w_res, b_res = w(ks[7], (D, D)), w(ks[16], (D,), 0.02)
        # sem_background_net = UnaryBlock(D, 11, use_bn=False)
        w_sem, b_sem = w(ks[8], (D, 11)), w(ks[17], (11,), 0.02)

        # Lane placement is encoded in zero-padded weight columns so the MXU
        # writes every head directly into its slab position (lane dense).
        wh = jnp.zeros((D, SLAB_W), jnp.float32)
        wh = wh.at[:, 0:D].set(w_feat).at[:, D:2 * D].set(w_feat)
        wh = wh.at[:, 2 * D + 3:2 * D + 5].set(w_bin)
        wh = wh.at[:, 2 * D + 5:2 * D + 6].set(w_obj)
        # Fused (2D, 128) weight: rows [0,D) = sem-background head (fed by
        # feat), rows [D,2D) = VotingModule conv3 residual + offset (fed by v2).
        wvs = jnp.zeros((2 * D, SLAB_W), jnp.float32)
        wvs = wvs.at[0:D, 2 * D + 6:2 * D + 17].set(w_sem)
        wvs = wvs.at[D:2 * D, D:2 * D].set(w_res)
        wvs = wvs.at[D:2 * D, 2 * D:2 * D + 3].set(w_off)

        bp = jnp.zeros((8, SLAB_W), jnp.float32)
        bp = bp.at[0, 0:D].set(b_trunk)
        bp = bp.at[1, 0:D].set(b_feat).at[1, D:2 * D].set(b_feat)
        bp = bp.at[1, 2 * D + 3:2 * D + 5].set(b_bin)
        bp = bp.at[1, 2 * D + 5:2 * D + 6].set(b_obj)
        bp = bp.at[2, 0:D].set(b_v1)
        bp = bp.at[3, 0:D].set(b_v2)
        bp = bp.at[4, D:2 * D].set(b_res).at[4, 2 * D:2 * D + 3].set(b_off)
        bp = bp.at[4, 2 * D + 6:2 * D + 17].set(b_sem)
        # row 6: L2-normalization mask over the vote-feature columns
        bp = bp.at[6, D:2 * D].set(1.0)
        # row 7: per-column LeakyReLU slope (0.1 on sem cols, 1.0 elsewhere)
        bp = bp.at[7, :].set(1.0)
        bp = bp.at[7, 2 * D + 6:2 * D + 17].set(0.1)

        cdt = compute_dtype
        self.params = dict(
            w_trunk=w_trunk,                      # trunk kept f32 (K=4)
            w_v1=w_v1.astype(cdt), w_v2=w_v2.astype(cdt),
            w_heads=wh.astype(cdt), w_votesem=wvs.astype(cdt),
            b_packed=bp)  # biases/masks stay f32 (used on the f32 accumulator)

    def forward(self, points, in_features):
        """points: (N, 3) float32, in_features: (N, in_dim) float32."""
        N = points.shape[0]
        B = 1
        D = self.D
        tm = _choose_tile(N)

        (point_features_nd, vote_features_nd, votes_nd,
         point_semantic_classes_binary, point_objectness_scores,
         fp_points_sem_classes) = _point_pipeline(points, in_features,
                                                  self.params, d=D, tm=tm)
        del point_features_nd, vote_features_nd  # consumed only by the fused
        # sem head / unimplemented proposal branch; no dead eager re-layouts.

        # torch layout: (1, N, 3) votes.
        point_votes = votes_nd[None]

        # ---- object-point selection (eager glue) ---------------------------
        # TODO(synk): data-dependent output shapes (torch.where) are not
        # jit-compatible; kept as eager host-side glue to match torch control
        # flow.  Only tiny index bookkeeping runs here.
        selected = jnp.argmax(point_semantic_classes_binary, axis=1)
        object_points_ids = jnp.where(selected == 1)[0]
        if int(object_points_ids.shape[0]) == 0:
            print("All points are predicted to be background.")
            object_points_ids = jnp.where(selected >= 0)[0]

        # ---- proposal branch ------------------------------------------------
        # TODO(synk): ProposalModule (FPS + ball query + PointNet) source not
        # provided; emit zero proposals, mirroring the module's pre_train path.
        P, S = self.num_proposal, self.nsample
        proposal_binary_mask = jnp.zeros((B, 2, P, S), jnp.float32)
        proposal_semantic_classes = jnp.zeros((B, self.C, P), jnp.float32)
        proposal_aggregation_features = jnp.zeros((B, 4, P), jnp.float32)
        proposal_objectness_scores = jnp.zeros((B, 2, P), jnp.float32)
        proposal_positions = jnp.zeros((B, P, 3), jnp.float32)
        proposal_idx = jnp.zeros((B, P, S), jnp.int32)

        proposal_ids = object_points_ids[proposal_idx]                  # (1,P,S)

        return (proposal_binary_mask, fp_points_sem_classes,
                proposal_semantic_classes, proposal_aggregation_features,
                proposal_objectness_scores, proposal_positions, proposal_ids,
                point_semantic_classes_binary, point_votes,
                point_objectness_scores)


# ---------------------------------------------------------------------------
# Example run
# ---------------------------------------------------------------------------

if __name__ == "__main__":
    key = jax.random.PRNGKey(0)
    k_pts, k_feat, k_w = jax.random.split(key, 3)

    N, IN_DIM = 256, 4
    points = jax.random.normal(k_pts, (N, 3), jnp.float32)
    in_features = jax.random.normal(k_feat, (N, IN_DIM), jnp.float32)

    model = MPAnetBinaryPallas(k_w, first_features_dim=32, in_dim=IN_DIM,
                               num_classes=8, num_proposal=8, nsample=16)
    outputs = model.forward(points, in_features)
    jax.block_until_ready(outputs)

    # light sanity check on the per-point outputs produced by the fused kernel
    ok = bool(jnp.isfinite(outputs[1]).all() & jnp.isfinite(outputs[7]).all()
              & jnp.isfinite(outputs[8]).all() & jnp.isfinite(outputs[9]).all())
    assert ok
    print("KERNEL_OK")
</pallas_src>

<mosaic_0001>
module attributes {stable_mosaic.version = 11 : i64} {
  func.func @_mpanet_fused_kernel(%arg0: i32, %arg1: memref<256x4xf32, #tpu.memory_space<vmem>>, %arg2: memref<4x32xf32, #tpu.memory_space<vmem>>, %arg3: memref<32x32xbf16, #tpu.memory_space<vmem>>, %arg4: memref<32x32xbf16, #tpu.memory_space<vmem>>, %arg5: memref<32x128xbf16, #tpu.memory_space<vmem>>, %arg6: memref<64x128xbf16, #tpu.memory_space<vmem>>, %arg7: memref<8x128xf32, #tpu.memory_space<vmem>>, %arg8: memref<256x128xbf16, #tpu.memory_space<vmem>>) attributes {dimension_semantics = [#tpu.dimension_semantics<parallel>], iteration_bounds = array<i64: 1>, scalar_prefetch = 0 : i64, scratch_operands = 0 : i64, tpu.core_type = #tpu.core_type<tc>, window_params = [{transform_indices = @transform_0, window_bounds = array<i64: 256, 4>}, {pipeline_mode = #tpu.pipeline_mode<synchronous>, transform_indices = @transform_1, window_bounds = array<i64: 4, 32>}, {pipeline_mode = #tpu.pipeline_mode<synchronous>, transform_indices = @transform_2, window_bounds = array<i64: 32, 32>}, {pipeline_mode = #tpu.pipeline_mode<synchronous>, transform_indices = @transform_3, window_bounds = array<i64: 32, 32>}, {pipeline_mode = #tpu.pipeline_mode<synchronous>, transform_indices = @transform_4, window_bounds = array<i64: 32, 128>}, {pipeline_mode = #tpu.pipeline_mode<synchronous>, transform_indices = @transform_5, window_bounds = array<i64: 64, 128>}, {pipeline_mode = #tpu.pipeline_mode<synchronous>, transform_indices = @transform_6, window_bounds = array<i64: 8, 128>}, {transform_indices = @transform_7, window_bounds = array<i64: 256, 128>}]} {
    %c0 = arith.constant 0 : index
    %c0_0 = arith.constant 0 : index
    %0 = vector.load %arg7[%c0, %c0_0] : memref<8x128xf32, #tpu.memory_space<vmem>>, vector<8x128xf32>
    %1 = vector.extract_strided_slice %0 {offsets = [6, 0], sizes = [1, 128], strides = [1, 1]} : vector<8x128xf32> to vector<1x128xf32>
    %2 = vector.extract_strided_slice %0 {offsets = [7, 0], sizes = [1, 128], strides = [1, 1]} : vector<8x128xf32> to vector<1x128xf32>
    %c0_1 = arith.constant 0 : index
    %c0_2 = arith.constant 0 : index
    %3 = vector.load %arg1[%c0_1, %c0_2] : memref<256x4xf32, #tpu.memory_space<vmem>>, vector<256x4xf32>
    %c0_3 = arith.constant 0 : index
    %c0_4 = arith.constant 0 : index
    %4 = vector.load %arg2[%c0_3, %c0_4] : memref<4x32xf32, #tpu.memory_space<vmem>>, vector<4x32xf32>
    %cst = arith.constant dense<0.000000e+00> : vector<256x32xf32>
    %5 = tpu.matmul %3, %4, %cst {dimension_numbers = #tpu.dot_dimension_numbers<[1], [0], [0], [1], [0, 0, 1, 1], [], []>} : vector<256x4xf32>, vector<4x32xf32>, vector<256x32xf32> -> vector<256x32xf32>
    %6 = vector.extract_strided_slice %0 {offsets = [0, 0], sizes = [1, 32], strides = [1, 1]} : vector<8x128xf32> to vector<1x32xf32>
    %7 = vector.broadcast %6 : vector<1x32xf32> to vector<256x32xf32>
    %8 = arith.addf %5, %7 : vector<256x32xf32>
    %cst_5 = arith.constant 0.000000e+00 : f32
    %9 = vector.broadcast %cst_5 : f32 to vector<256x32xf32>
    %10 = arith.maximumf %8, %9 : vector<256x32xf32>
    %11 = arith.truncf %10 : vector<256x32xf32> to vector<256x32xbf16>
    %c0_6 = arith.constant 0 : index
    %c0_7 = arith.constant 0 : index
    %12 = vector.load %arg5[%c0_6, %c0_7] : memref<32x128xbf16, #tpu.memory_space<vmem>>, vector<32x128xbf16>
    %cst_8 = arith.constant dense<0.000000e+00> : vector<256x128xf32>
    %13 = tpu.matmul %11, %12, %cst_8 {dimension_numbers = #tpu.dot_dimension_numbers<[1], [0], [0], [1], [0, 0, 1, 1], [], []>} : vector<256x32xbf16>, vector<32x128xbf16>, vector<256x128xf32> -> vector<256x128xf32>
    %14 = vector.extract_strided_slice %0 {offsets = [1, 0], sizes = [1, 128], strides = [1, 1]} : vector<8x128xf32> to vector<1x128xf32>
    %15 = vector.broadcast %14 : vector<1x128xf32> to vector<256x128xf32>
    %16 = arith.addf %13, %15 : vector<256x128xf32>
    %17 = vector.extract_strided_slice %16 {offsets = [0, 0], sizes = [256, 32], strides = [1, 1]} : vector<256x128xf32> to vector<256x32xf32>
    %18 = arith.truncf %17 : vector<256x32xf32> to vector<256x32xbf16>
    %c0_9 = arith.constant 0 : index
    %c0_10 = arith.constant 0 : index
    %19 = vector.load %arg3[%c0_9, %c0_10] : memref<32x32xbf16, #tpu.memory_space<vmem>>, vector<32x32xbf16>
    %cst_11 = arith.constant dense<0.000000e+00> : vector<256x32xf32>
    %20 = tpu.matmul %18, %19, %cst_11 {dimension_numbers = #tpu.dot_dimension_numbers<[1], [0], [0], [1], [0, 0, 1, 1], [], []>} : vector<256x32xbf16>, vector<32x32xbf16>, vector<256x32xf32> -> vector<256x32xf32>
    %21 = vector.extract_strided_slice %0 {offsets = [2, 0], sizes = [1, 32], strides = [1, 1]} : vector<8x128xf32> to vector<1x32xf32>
    %22 = vector.broadcast %21 : vector<1x32xf32> to vector<256x32xf32>
    %23 = arith.addf %20, %22 : vector<256x32xf32>
    %cst_12 = arith.constant 0.000000e+00 : f32
    %24 = vector.broadcast %cst_12 : f32 to vector<256x32xf32>
    %25 = arith.maximumf %23, %24 : vector<256x32xf32>
    %26 = arith.truncf %25 : vector<256x32xf32> to vector<256x32xbf16>
    %c0_13 = arith.constant 0 : index
    %c0_14 = arith.constant 0 : index
    %27 = vector.load %arg4[%c0_13, %c0_14] : memref<32x32xbf16, #tpu.memory_space<vmem>>, vector<32x32xbf16>
    %cst_15 = arith.constant dense<0.000000e+00> : vector<256x32xf32>
    %28 = tpu.matmul %26, %27, %cst_15 {dimension_numbers = #tpu.dot_dimension_numbers<[1], [0], [0], [1], [0, 0, 1, 1], [], []>} : vector<256x32xbf16>, vector<32x32xbf16>, vector<256x32xf32> -> vector<256x32xf32>
    %29 = vector.extract_strided_slice %0 {offsets = [3, 0], sizes = [1, 32], strides = [1, 1]} : vector<8x128xf32> to vector<1x32xf32>
    %30 = vector.broadcast %29 : vector<1x32xf32> to vector<256x32xf32>
    %31 = arith.addf %28, %30 : vector<256x32xf32>
    %cst_16 = arith.constant 0.000000e+00 : f32
    %32 = vector.broadcast %cst_16 : f32 to vector<256x32xf32>
    %33 = arith.maximumf %31, %32 : vector<256x32xf32>
    %34 = arith.truncf %33 : vector<256x32xf32> to vector<256x32xbf16>
    %35 = tpu.concatenate %18, %34 in 1 : vector<256x32xbf16>, vector<256x32xbf16> -> vector<256x64xbf16>
    %c0_17 = arith.constant 0 : index
    %c0_18 = arith.constant 0 : index
    %36 = vector.load %arg6[%c0_17, %c0_18] : memref<64x128xbf16, #tpu.memory_space<vmem>>, vector<64x128xbf16>
    %cst_19 = arith.constant dense<0.000000e+00> : vector<256x128xf32>
    %37 = tpu.matmul %35, %36, %cst_19 {dimension_numbers = #tpu.dot_dimension_numbers<[1], [0], [0], [1], [0, 0, 1, 1], [], []>} : vector<256x64xbf16>, vector<64x128xbf16>, vector<256x128xf32> -> vector<256x128xf32>
    %38 = vector.extract_strided_slice %0 {offsets = [4, 0], sizes = [1, 128], strides = [1, 1]} : vector<8x128xf32> to vector<1x128xf32>
    %39 = vector.broadcast %38 : vector<1x128xf32> to vector<256x128xf32>
    %40 = arith.addf %37, %39 : vector<256x128xf32>
    %cst_20 = arith.constant 0.000000e+00 : f32
    %41 = vector.broadcast %cst_20 : f32 to vector<256x128xf32>
    %42 = arith.cmpf oge, %40, %41 : vector<256x128xf32>
    %43 = vector.broadcast %2 : vector<1x128xf32> to vector<256x128xf32>
    %44 = arith.mulf %40, %43 : vector<256x128xf32>
    %45 = arith.select %42, %40, %44 : vector<256x128xi1>, vector<256x128xf32>
    %46 = arith.addf %16, %45 : vector<256x128xf32>
    %47 = arith.mulf %46, %46 : vector<256x128xf32>
    %48 = vector.broadcast %1 : vector<1x128xf32> to vector<256x128xf32>
    %49 = arith.mulf %47, %48 : vector<256x128xf32>
    %cst_21 = arith.constant dense<0.000000e+00> : vector<256xf32>
    %50 = vector.multi_reduction <add>, %49, %cst_21 [1] : vector<256x128xf32> to vector<256xf32>
    %51 = vector.shape_cast %50 : vector<256xf32> to vector<256x1xf32>
    %cst_22 = arith.constant 9.99999996E-13 : f32
    %52 = vector.broadcast %cst_22 : f32 to vector<256x1xf32>
    %53 = arith.addf %51, %52 : vector<256x1xf32>
    %54 = math.rsqrt %53 : vector<256x1xf32>
    %cst_23 = arith.constant 1.000000e+00 : f32
    %55 = vector.broadcast %cst_23 : f32 to vector<256x1xf32>
    %56 = arith.subf %54, %55 : vector<256x1xf32>
    %57 = vector.broadcast %1 : vector<1x128xf32> to vector<256x128xf32>
    %58 = vector.broadcast %56 : vector<256x1xf32> to vector<256x128xf32>
    %59 = arith.mulf %57, %58 : vector<256x128xf32>
    %cst_24 = arith.constant 1.000000e+00 : f32
    %60 = vector.broadcast %cst_24 : f32 to vector<256x128xf32>
    %61 = arith.addf %60, %59 : vector<256x128xf32>
    %62 = arith.mulf %46, %61 : vector<256x128xf32>
    %63 = arith.truncf %62 : vector<256x128xf32> to vector<256x128xbf16>
    %c0_25 = arith.constant 0 : index
    %c0_26 = arith.constant 0 : index
    %64 = vector.load %arg8[%c0_25, %c0_26] : memref<256x128xbf16, #tpu.memory_space<vmem>>, vector<256x128xbf16>
    tpu.vector_store %arg8[%c0_25, %c0_26], %63 {strides = array<i32>} : memref<256x128xbf16, #tpu.memory_space<vmem>>, vector<256x128xbf16>,
    return
  }
  func.func @transform_0(%arg0: i32) -> (i32, i32) {
    %c0_i32 = arith.constant 0 : i32
    %c0_i32_0 = arith.constant 0 : i32
    return %arg0, %c0_i32 : i32, i32
  }
  func.func @transform_1(%arg0: i32) -> (i32, i32) {
    %c0_i32 = arith.constant 0 : i32
    %c0_i32_0 = arith.constant 0 : i32
    %c0_i32_1 = arith.constant 0 : i32
    return %c0_i32, %c0_i32_0 : i32, i32
  }
  func.func @transform_2(%arg0: i32) -> (i32, i32) {
    %c0_i32 = arith.constant 0 : i32
    %c0_i32_0 = arith.constant 0 : i32
    %c0_i32_1 = arith.constant 0 : i32
    return %c0_i32, %c0_i32_0 : i32, i32
  }
  func.func @transform_3(%arg0: i32) -> (i32, i32) {
    %c0_i32 = arith.constant 0 : i32
    %c0_i32_0 = arith.constant 0 : i32
    %c0_i32_1 = arith.constant 0 : i32
    return %c0_i32, %c0_i32_0 : i32, i32
  }
  func.func @transform_4(%arg0: i32) -> (i32, i32) {
    %c0_i32 = arith.constant 0 : i32
    %c0_i32_0 = arith.constant 0 : i32
    %c0_i32_1 = arith.constant 0 : i32
    return %c0_i32, %c0_i32_0 : i32, i32
  }
  func.func @transform_5(%arg0: i32) -> (i32, i32) {
    %c0_i32 = arith.constant 0 : i32
    %c0_i32_0 = arith.constant 0 : i32
    %c0_i32_1 = arith.constant 0 : i32
    return %c0_i32, %c0_i32_0 : i32, i32
  }
  func.func @transform_6(%arg0: i32) -> (i32, i32) {
    %c0_i32 = arith.constant 0 : i32
    %c0_i32_0 = arith.constant 0 : i32
    %c0_i32_1 = arith.constant 0 : i32
    return %c0_i32, %c0_i32_0 : i32, i32
  }
  func.func @transform_7(%arg0: i32) -> (i32, i32) {
    %c0_i32 = arith.constant 0 : i32
    %c0_i32_0 = arith.constant 0 : i32
    return %arg0, %c0_i32 : i32, i32
  }
}

</mosaic_0001>

<llo_original>
// kernel: _point_pipeline.1
$region0: #{_point_pipeline.1}
  #allocation0 [shape = 'u32[]', space=smem, size = 0x4, offset = 0x4, fixed_abs, tag = 'smem constant byte address 0x4 - core index']
  #allocation1 [shape = 'u32[72,128]{1,0:T(1,128)}', space=vmem, size = 0x9000, scoped, tag = 'internal scratch']
  %s0 = inlined_call_operand.vmem [shape: f32[256,4], index: 0, kind: input, shape index: {}]
  %s1 = inlined_call_operand.vmem [shape: f32[4,32], index: 1, kind: input, shape index: {}]
  %s2 = inlined_call_operand.vmem [shape: bf16[32,32], index: 2, kind: input, shape index: {}]
  %s3 = inlined_call_operand.vmem [shape: bf16[32,32], index: 3, kind: input, shape index: {}]
  %s4 = inlined_call_operand.vmem [shape: bf16[32,128], index: 4, kind: input, shape index: {}]
  %s5 = inlined_call_operand.vmem [shape: bf16[64,128], index: 5, kind: input, shape index: {}]
  %s6 = inlined_call_operand.vmem [shape: f32[8,128], index: 6, kind: input, shape index: {}]
  %s7 = inlined_call_operand.vmem [shape: bf16[256,128], index: 7, kind: output, shape index: {}]
  %s8 = sld [smem:[#allocation0]]
  $region38: #{_point_pipeline.1} parent=0
    _
  %s10 = ssub.s32 1, %s8
  %s11 = scalar_select 0, %s10, %s8
  // Predicated region
  $region2: #{_point_pipeline.1} parent=0 // pred_check
    _
  $region3: #{_point_pipeline.1} parent=0 // pred_check_branch
    %13 = sbr.rel (0) target = $region5
  $region4: #{_point_pipeline.1} parent=0 // pred_region
    _
  $region5: #{_point_pipeline.1} parent=0 // pred_fallthru
    _
  // Predicated region
  $region6: #{_point_pipeline.1} parent=0 // pred_check
    _
  $region7: #{_point_pipeline.1} parent=0 // pred_check_branch
    %15 = sbr.rel (0) target = $region9
  $region8: #{_point_pipeline.1} parent=0 // pred_region
    _
  $region9: #{_point_pipeline.1} parent=0 // pred_fallthru
    _
  // Predicated region
  $region10: #{_point_pipeline.1} parent=0 // pred_check
    _
  $region11: #{_point_pipeline.1} parent=0 // pred_check_branch
    %17 = sbr.rel (0) target = $region13
  $region12: #{_point_pipeline.1} parent=0 // pred_region
    _
  $region13: #{_point_pipeline.1} parent=0 // pred_fallthru
    _
  // Predicated region
  $region14: #{_point_pipeline.1} parent=0 // pred_check
    _
  $region15: #{_point_pipeline.1} parent=0 // pred_check_branch
    %19 = sbr.rel (0) target = $region17
  $region16: #{_point_pipeline.1} parent=0 // pred_region
    _
  $region17: #{_point_pipeline.1} parent=0 // pred_fallthru
    _
  // Predicated region
  $region18: #{_point_pipeline.1} parent=0 // pred_check
    _
  $region19: #{_point_pipeline.1} parent=0 // pred_check_branch
    %21 = sbr.rel (0) target = $region21
  $region20: #{_point_pipeline.1} parent=0 // pred_region
    _
  $region21: #{_point_pipeline.1} parent=0 // pred_fallthru
    _
  // Predicated region
  $region22: #{_point_pipeline.1} parent=0 // pred_check
    _
  $region23: #{_point_pipeline.1} parent=0 // pred_check_branch
    %23 = sbr.rel (0) target = $region25
  $region24: #{_point_pipeline.1} parent=0 // pred_region
    _
  $region25: #{_point_pipeline.1} parent=0 // pred_fallthru
    _
  // Predicated region
  $region26: #{_point_pipeline.1} parent=0 // pred_check
    _
  $region27: #{_point_pipeline.1} parent=0 // pred_check_branch
    %25 = sbr.rel (0) target = $region29
  $region28: #{_point_pipeline.1} parent=0 // pred_region
    _
  $region29: #{_point_pipeline.1} parent=0 // pred_fallthru
    _
  %v27 = vld [vmem:[%s6] sm:$0xff]
  %v28 = vld [vmem:[%s0] sm:$0xff]
  %v29 = vld [vmem:[%s0 + $0x8] sm:$0xff]
  %v30 = vld [vmem:[%s0 + $0x10] sm:$0xff]
  %v31 = vld [vmem:[%s0 + $0x18] sm:$0xff]
  %v32 = vld [vmem:[%s0 + $0x20] sm:$0xff]
  %v33 = vld [vmem:[%s0 + $0x28] sm:$0xff]
  %v34 = vld [vmem:[%s0 + $0x30] sm:$0xff]
  %v35 = vld [vmem:[%s0 + $0x38] sm:$0xff]
  %v36 = vld [vmem:[%s0 + $0x40] sm:$0xff]
  %v37 = vld [vmem:[%s0 + $0x48] sm:$0xff]
  %v38 = vld [vmem:[%s0 + $0x50] sm:$0xff]
  %v39 = vld [vmem:[%s0 + $0x58] sm:$0xff]
  %v40 = vld [vmem:[%s0 + $0x60] sm:$0xff]
  %v41 = vld [vmem:[%s0 + $0x68] sm:$0xff]
  %v42 = vld [vmem:[%s0 + $0x70] sm:$0xff]
  %v43 = vld [vmem:[%s0 + $0x78] sm:$0xff]
  %v44 = vld [vmem:[%s0 + $0x80] sm:$0xff]
  %v45 = vld [vmem:[%s0 + $0x88] sm:$0xff]
  %v46 = vld [vmem:[%s0 + $0x90] sm:$0xff]
  %v47 = vld [vmem:[%s0 + $0x98] sm:$0xff]
  %v48 = vld [vmem:[%s0 + $0xa0] sm:$0xff]
  %v49 = vld [vmem:[%s0 + $0xa8] sm:$0xff]
  %v50 = vld [vmem:[%s0 + $0xb0] sm:$0xff]
  %v51 = vld [vmem:[%s0 + $0xb8] sm:$0xff]
  %v52 = vld [vmem:[%s0 + $0xc0] sm:$0xff]
  %v53 = vld [vmem:[%s0 + $0xc8] sm:$0xff]
  %v54 = vld [vmem:[%s0 + $0xd0] sm:$0xff]
  %v55 = vld [vmem:[%s0 + $0xd8] sm:$0xff]
  %v56 = vld [vmem:[%s0 + $0xe0] sm:$0xff]
  %v57 = vld [vmem:[%s0 + $0xe8] sm:$0xff]
  %v58 = vld [vmem:[%s0 + $0xf0] sm:$0xff]
  %v59 = vld [vmem:[%s0 + $0xf8] sm:$0xff]
  %v60 = vld [vmem:[%s1] sm:$0xf]
  %v61 = vperm.slane %v27, 0
  %vm62 = vcmask 31744
  %v64 = vsel %vm62, %v28, 0
  %v67 = vsel %vm62, %v29, 0
  %v70 = vsel %vm62, %v30, 0
  %v73 = vsel %vm62, %v31, 0
  %v76 = vsel %vm62, %v32, 0
  %v79 = vsel %vm62, %v33, 0
  %v82 = vsel %vm62, %v34, 0
  %v85 = vsel %vm62, %v35, 0
  %v88 = vsel %vm62, %v36, 0
  %v91 = vsel %vm62, %v37, 0
  %v94 = vsel %vm62, %v38, 0
  %v97 = vsel %vm62, %v39, 0
  %v100 = vsel %vm62, %v40, 0
  %v103 = vsel %vm62, %v41, 0
  %v106 = vsel %vm62, %v42, 0
  %v109 = vsel %vm62, %v43, 0
  %v112 = vsel %vm62, %v44, 0
  %v115 = vsel %vm62, %v45, 0
  %v118 = vsel %vm62, %v46, 0
  %v121 = vsel %vm62, %v47, 0
  %v124 = vsel %vm62, %v48, 0
  %v127 = vsel %vm62, %v49, 0
  %v130 = vsel %vm62, %v50, 0
  %v133 = vsel %vm62, %v51, 0
  %v136 = vsel %vm62, %v52, 0
  %v139 = vsel %vm62, %v53, 0
  %v142 = vsel %vm62, %v54, 0
  %v145 = vsel %vm62, %v55, 0
  %v148 = vsel %vm62, %v56, 0
  %v151 = vsel %vm62, %v57, 0
  %v154 = vsel %vm62, %v58, 0
  %v157 = vsel %vm62, %v59, 0
  %vm159 = vcmask 1043456
  %v161 = vsel %vm159, %v60, 0
  %163 = vmatpush.msra.mxu0 0.0
  %164 = vmatpush.msra.mxu0 0.0
  %165 = vmatpush.msra.mxu0 0.0
  %166 = vmatpush.msra.mxu0 0.0
  %167 = vmatpush.msra.mxu0 0.0
  %168 = vmatpush.msra.mxu0 0.0
  %169 = vmatpush.msra.mxu0 0.0
  %170 = vmatpush.msra.mxu0 0.0
  %171 = vmatpush.msra.mxu0 0.0
  %172 = vmatpush.msra.mxu0 0.0
  %173 = vmatpush.msra.mxu0 0.0
  %174 = vmatpush.msra.mxu0 0.0
  %175 = vmatpush.msra.mxu0 0.0
  %176 = vmatpush.msra.mxu0 0.0
  %177 = vmatpush.msra.mxu0 0.0
  %178 = vmatpush.msra.mxu0 %v161
  %179 = vmatmul.f32.gmra.mxu0 %v64
  %v180 = vpop.f32.mrf.mxu0
  %v181 = vadd.f32 %v61, %v180
  %182 = vmatmul.f32.gmra.mxu0 %v67
  %v183 = vpop.f32.mrf.mxu0
  %v184 = vadd.f32 %v61, %v183
  %185 = vmatmul.f32.gmra.mxu0 %v70
  %v186 = vpop.f32.mrf.mxu0
  %v187 = vadd.f32 %v61, %v186
  %188 = vmatmul.f32.gmra.mxu0 %v73
  %v189 = vpop.f32.mrf.mxu0
  %v190 = vadd.f32 %v61, %v189
  %191 = vmatmul.f32.gmra.mxu0 %v76
  %v192 = vpop.f32.mrf.mxu0
  %v193 = vadd.f32 %v61, %v192
  %194 = vmatmul.f32.gmra.mxu0 %v79
  %v195 = vpop.f32.mrf.mxu0
  %v196 = vadd.f32 %v61, %v195
  %197 = vmatmul.f32.gmra.mxu0 %v82
  %v198 = vpop.f32.mrf.mxu0
  %v199 = vadd.f32 %v61, %v198
  %200 = vmatmul.f32.gmra.mxu0 %v85
  %v201 = vpop.f32.mrf.mxu0
  %v202 = vadd.f32 %v61, %v201
  %203 = vmatmul.f32.gmra.mxu0 %v88
  %v204 = vpop.f32.mrf.mxu0
  %v205 = vadd.f32 %v61, %v204
  %206 = vmatmul.f32.gmra.mxu0 %v91
  %v207 = vpop.f32.mrf.mxu0
  %v208 = vadd.f32 %v61, %v207
  %209 = vmatmul.f32.gmra.mxu0 %v94
  %v210 = vpop.f32.mrf.mxu0
  %v211 = vadd.f32 %v61, %v210
  %212 = vmatmul.f32.gmra.mxu0 %v97
  %v213 = vpop.f32.mrf.mxu0
  %v214 = vadd.f32 %v61, %v213
  %215 = vmatmul.f32.gmra.mxu0 %v100
  %v216 = vpop.f32.mrf.mxu0
  %v217 = vadd.f32 %v61, %v216
  %218 = vmatmul.f32.gmra.mxu0 %v103
  %v219 = vpop.f32.mrf.mxu0
  %v220 = vadd.f32 %v61, %v219
  %221 = vmatmul.f32.gmra.mxu0 %v106
  %v222 = vpop.f32.mrf.mxu0
  %v223 = vadd.f32 %v61, %v222
  %224 = vmatmul.f32.gmra.mxu0 %v109
  %v225 = vpop.f32.mrf.mxu0
  %v226 = vadd.f32 %v61, %v225
  %227 = vmatmul.f32.gmra.mxu0 %v112
  %v228 = vpop.f32.mrf.mxu0
  %v229 = vadd.f32 %v61, %v228
  %230 = vmatmul.f32.gmra.mxu0 %v115
  %v231 = vpop.f32.mrf.mxu0
  %v232 = vadd.f32 %v61, %v231
  %233 = vmatmul.f32.gmra.mxu0 %v118
  %v234 = vpop.f32.mrf.mxu0
  %v235 = vadd.f32 %v61, %v234
  %236 = vmatmul.f32.gmra.mxu0 %v121
  %v237 = vpop.f32.mrf.mxu0
  %v238 = vadd.f32 %v61, %v237
  %239 = vmatmul.f32.gmra.mxu0 %v124
  %v240 = vpop.f32.mrf.mxu0
  %v241 = vadd.f32 %v61, %v240
  %242 = vmatmul.f32.gmra.mxu0 %v127
  %v243 = vpop.f32.mrf.mxu0
  %v244 = vadd.f32 %v61, %v243
  %245 = vmatmul.f32.gmra.mxu0 %v130
  %v246 = vpop.f32.mrf.mxu0
  %v247 = vadd.f32 %v61, %v246
  %248 = vmatmul.f32.gmra.mxu0 %v133
  %v249 = vpop.f32.mrf.mxu0
  %v250 = vadd.f32 %v61, %v249
  %251 = vmatmul.f32.gmra.mxu0 %v136
  %v252 = vpop.f32.mrf.mxu0
  %v253 = vadd.f32 %v61, %v252
  %254 = vmatmul.f32.gmra.mxu0 %v139
  %v255 = vpop.f32.mrf.mxu0
  %v256 = vadd.f32 %v61, %v255
  %257 = vmatmul.f32.gmra.mxu0 %v142
  %v258 = vpop.f32.mrf.mxu0
  %v259 = vadd.f32 %v61, %v258
  %260 = vmatmul.f32.gmra.mxu0 %v145
  %v261 = vpop.f32.mrf.mxu0
  %v262 = vadd.f32 %v61, %v261
  %263 = vmatmul.f32.gmra.mxu0 %v148
  %v264 = vpop.f32.mrf.mxu0
  %v265 = vadd.f32 %v61, %v264
  %266 = vmatmul.f32.gmra.mxu0 %v151
  %v267 = vpop.f32.mrf.mxu0
  %v268 = vadd.f32 %v61, %v267
  %269 = vmatmul.f32.gmra.mxu0 %v154
  %v270 = vpop.f32.mrf.mxu0
  %v271 = vadd.f32 %v61, %v270
  %272 = vmatmul.f32.gmra.mxu0 %v157
  %v273 = vpop.f32.mrf.mxu0
  %v274 = vadd.f32 %v61, %v273
  %275 = vdwg.mxu0
  %v276 = vmax.f32 %v181, 0.0
  %v277 = vmax.f32 %v184, 0.0
  %v278 = vmax.f32 %v187, 0.0
  %v279 = vmax.f32 %v190, 0.0
  %v280 = vmax.f32 %v193, 0.0
  %v281 = vmax.f32 %v196, 0.0
  %v282 = vmax.f32 %v199, 0.0
  %v283 = vmax.f32 %v202, 0.0
  %v284 = vmax.f32 %v205, 0.0
  %v285 = vmax.f32 %v208, 0.0
  %v286 = vmax.f32 %v211, 0.0
  %v287 = vmax.f32 %v214, 0.0
  %v288 = vmax.f32 %v217, 0.0
  %v289 = vmax.f32 %v220, 0.0
  %v290 = vmax.f32 %v223, 0.0
  %v291 = vmax.f32 %v226, 0.0
  %v292 = vmax.f32 %v229, 0.0
  %v293 = vmax.f32 %v232, 0.0
  %v294 = vmax.f32 %v235, 0.0
  %v295 = vmax.f32 %v238, 0.0
  %v296 = vmax.f32 %v241, 0.0
  %v297 = vmax.f32 %v244, 0.0
  %v298 = vmax.f32 %v247, 0.0
  %v299 = vmax.f32 %v250, 0.0
  %v300 = vmax.f32 %v253, 0.0
  %v301 = vmax.f32 %v256, 0.0
  %v302 = vmax.f32 %v259, 0.0
  %v303 = vmax.f32 %v262, 0.0
  %v304 = vmax.f32 %v265, 0.0
  %v305 = vmax.f32 %v268, 0.0
  %v306 = vmax.f32 %v271, 0.0
  %v307 = vmax.f32 %v274, 0.0
  %v308 = vpack.c.bf16 %v277, %v276
  %v309 = vpack.c.bf16 %v279, %v278
  %v310 = vpack.c.bf16 %v281, %v280
  %v311 = vpack.c.bf16 %v283, %v282
  %v312 = vpack.c.bf16 %v285, %v284
  %v313 = vpack.c.bf16 %v287, %v286
  %v314 = vpack.c.bf16 %v289, %v288
  %v315 = vpack.c.bf16 %v291, %v290
  %v316 = vpack.c.bf16 %v293, %v292
  %v317 = vpack.c.bf16 %v295, %v294
  %v318 = vpack.c.bf16 %v297, %v296
  %v319 = vpack.c.bf16 %v299, %v298
  %v320 = vpack.c.bf16 %v301, %v300
  %v321 = vpack.c.bf16 %v303, %v302
  %v322 = vpack.c.bf16 %v305, %v304
  %v323 = vpack.c.bf16 %v307, %v306
  %v324 = vld [vmem:[%s4] sm:$0xf]
  %v325 = vld [vmem:[%s4 + $0x4] sm:$0xf]
  %v326 = vld [vmem:[%s4 + $0x8] sm:$0xf]
  %v327 = vld [vmem:[%s4 + $0xc] sm:$0xf]
  %v328 = vperm.slane %v27, 1
  %v333 = vunpack.c.l.b16 %v324
  %v334 = vunpack.c.l.b16 %v325
  %v335 = vunpack.c.l.b16 %v326
  %v336 = vunpack.c.l.b16 %v327
  %v337 = vpack.c.b16 %v334, %v333
  %v338 = vpack.c.b16 %v336, %v335
  %vm341 = vcmask 261120
  %v343 = vsel %vm341, %v308, 0
  %v346 = vsel %vm341, %v309, 0
  %v349 = vsel %vm341, %v310, 0
  %v352 = vsel %vm341, %v311, 0
  %v355 = vsel %vm341, %v312, 0
  %v358 = vsel %vm341, %v313, 0
  %v361 = vsel %vm341, %v314, 0
  %v364 = vsel %vm341, %v315, 0
  %v367 = vsel %vm341, %v316, 0
  %v370 = vsel %vm341, %v317, 0
  %v373 = vsel %vm341, %v318, 0
  %v376 = vsel %vm341, %v319, 0
  %v379 = vsel %vm341, %v320, 0
  %v382 = vsel %vm341, %v321, 0
  %v385 = vsel %vm341, %v322, 0
  %v388 = vsel %vm341, %v323, 0
  %390 = vmatpush.bf16.msra.mxu0 0
  %391 = vmatpush.bf16.msra.mxu0 0
  %392 = vmatpush.bf16.msra.mxu0 0
  %393 = vmatpush.bf16.msra.mxu0 0
  %394 = vmatpush.bf16.msra.mxu0 0
  %395 = vmatpush.bf16.msra.mxu0 0
  %396 = vmatpush.bf16.msra.mxu0 %v338
  %397 = vmatpush.bf16.msra.mxu0 %v337
  %398 = vmatmul.bf16.gmra.mxu0 %v343
  %v399 = vpop.f32.mrf.mxu0
  %v400 = vadd.f32 %v328, %v399
  %v401 = vpop.f32.mrf.mxu0
  %v402 = vadd.f32 %v328, %v401
  %403 = vmatmul.bf16.gmra.mxu0 %v346
  %v404 = vpop.f32.mrf.mxu0
  %v405 = vadd.f32 %v328, %v404
  %v406 = vpop.f32.mrf.mxu0
  %v407 = vadd.f32 %v328, %v406
  %408 = vmatmul.bf16.gmra.mxu0 %v349
  %v409 = vpop.f32.mrf.mxu0
  %v410 = vadd.f32 %v328, %v409
  %v411 = vpop.f32.mrf.mxu0
  %v412 = vadd.f32 %v328, %v411
  %413 = vmatmul.bf16.gmra.mxu0 %v352
  %v414 = vpop.f32.mrf.mxu0
  %v415 = vadd.f32 %v328, %v414
  %v416 = vpop.f32.mrf.mxu0
  %v417 = vadd.f32 %v328, %v416
  %418 = vmatmul.bf16.gmra.mxu0 %v355
  %v419 = vpop.f32.mrf.mxu0
  %v420 = vadd.f32 %v328, %v419
  %v421 = vpop.f32.mrf.mxu0
  %v422 = vadd.f32 %v328, %v421
  %423 = vmatmul.bf16.gmra.mxu0 %v358
  %v424 = vpop.f32.mrf.mxu0
  %v425 = vadd.f32 %v328, %v424
  %v426 = vpop.f32.mrf.mxu0
  %v427 = vadd.f32 %v328, %v426
  %428 = vmatmul.bf16.gmra.mxu0 %v361
  %v429 = vpop.f32.mrf.mxu0
  %v430 = vadd.f32 %v328, %v429
  %v431 = vpop.f32.mrf.mxu0
  %v432 = vadd.f32 %v328, %v431
  %433 = vmatmul.bf16.gmra.mxu0 %v364
  %v434 = vpop.f32.mrf.mxu0
  %v435 = vadd.f32 %v328, %v434
  %v436 = vpop.f32.mrf.mxu0
  %v437 = vadd.f32 %v328, %v436
  %438 = vmatmul.bf16.gmra.mxu0 %v367
  %v439 = vpop.f32.mrf.mxu0
  %v440 = vadd.f32 %v328, %v439
  %v441 = vpop.f32.mrf.mxu0
  %v442 = vadd.f32 %v328, %v441
  %443 = vmatmul.bf16.gmra.mxu0 %v370
  %v444 = vpop.f32.mrf.mxu0
  %v445 = vadd.f32 %v328, %v444
  %v446 = vpop.f32.mrf.mxu0
  %v447 = vadd.f32 %v328, %v446
  %448 = vmatmul.bf16.gmra.mxu0 %v373
  %v449 = vpop.f32.mrf.mxu0
  %v450 = vadd.f32 %v328, %v449
  %v451 = vpop.f32.mrf.mxu0
  %v452 = vadd.f32 %v328, %v451
  %453 = vmatmul.bf16.gmra.mxu0 %v376
  %v454 = vpop.f32.mrf.mxu0
  %v455 = vadd.f32 %v328, %v454
  %v456 = vpop.f32.mrf.mxu0
  %v457 = vadd.f32 %v328, %v456
  %458 = vmatmul.bf16.gmra.mxu0 %v379
  %v459 = vpop.f32.mrf.mxu0
  %v460 = vadd.f32 %v328, %v459
  %v461 = vpop.f32.mrf.mxu0
  %v462 = vadd.f32 %v328, %v461
  %463 = vmatmul.bf16.gmra.mxu0 %v382
  %v464 = vpop.f32.mrf.mxu0
  %v465 = vadd.f32 %v328, %v464
  %v466 = vpop.f32.mrf.mxu0
  %v467 = vadd.f32 %v328, %v466
  %468 = vmatmul.bf16.gmra.mxu0 %v385
  %v469 = vpop.f32.mrf.mxu0
  %v470 = vadd.f32 %v328, %v469
  %v471 = vpop.f32.mrf.mxu0
  %v472 = vadd.f32 %v328, %v471
  %473 = vmatmul.bf16.gmra.mxu0 %v388
  %v474 = vpop.f32.mrf.mxu0
  %v475 = vadd.f32 %v328, %v474
  %v476 = vpop.f32.mrf.mxu0
  %v477 = vadd.f32 %v328, %v476
  %478 = vdwg.mxu0
  %v479 = vpack.c.bf16 %v400, %v400
  %v480 = vpack.c.bf16 %v402, %v402
  %v481 = vpack.c.bf16 %v405, %v405
  %v482 = vpack.c.bf16 %v407, %v407
  %v483 = vpack.c.bf16 %v410, %v410
  %v484 = vpack.c.bf16 %v412, %v412
  %v485 = vpack.c.bf16 %v415, %v415
  %v486 = vpack.c.bf16 %v417, %v417
  %v487 = vpack.c.bf16 %v420, %v420
  %v488 = vpack.c.bf16 %v422, %v422
  %v489 = vpack.c.bf16 %v425, %v425
  %v490 = vpack.c.bf16 %v427, %v427
  %v491 = vpack.c.bf16 %v430, %v430
  %v492 = vpack.c.bf16 %v432, %v432
  %v493 = vpack.c.bf16 %v435, %v435
  %v494 = vpack.c.bf16 %v437, %v437
  %v495 = vpack.c.bf16 %v440, %v440
  %v496 = vpack.c.bf16 %v442, %v442
  %v497 = vpack.c.bf16 %v445, %v445
  %v498 = vpack.c.bf16 %v447, %v447
  %v499 = vpack.c.bf16 %v450, %v450
  %v500 = vpack.c.bf16 %v452, %v452
  %v501 = vpack.c.bf16 %v455, %v455
  %v502 = vpack.c.bf16 %v457, %v457
  %v503 = vpack.c.bf16 %v460, %v460
  %v504 = vpack.c.bf16 %v462, %v462
  %v505 = vpack.c.bf16 %v465, %v465
  %v506 = vpack.c.bf16 %v467, %v467
  %v507 = vpack.c.bf16 %v470, %v470
  %v508 = vpack.c.bf16 %v472, %v472
  %v509 = vpack.c.bf16 %v475, %v475
  %v510 = vpack.c.bf16 %v477, %v477
  %v511 = vld [vmem:[%s2] sm:$0xf]
  %v512 = vld [vmem:[%s2 + $0x4] sm:$0xf]
  %v513 = vld [vmem:[%s2 + $0x8] sm:$0xf]
  %v514 = vld [vmem:[%s2 + $0xc] sm:$0xf]
  %v515 = vperm.slane %v27, 2
  %v548 = vunpack.c.l.b16 %v479
  %v549 = vunpack.c.l.b16 %v480
  %v550 = vunpack.c.l.b16 %v481
  %v551 = vunpack.c.l.b16 %v482
  %v552 = vunpack.c.l.b16 %v483
  %v553 = vunpack.c.l.b16 %v484
  %v554 = vunpack.c.l.b16 %v485
  %v555 = vunpack.c.l.b16 %v486
  %v556 = vunpack.c.l.b16 %v487
  %v557 = vunpack.c.l.b16 %v488
  %v558 = vunpack.c.l.b16 %v489
  %v559 = vunpack.c.l.b16 %v490
  %v560 = vunpack.c.l.b16 %v491
  %v561 = vunpack.c.l.b16 %v492
  %v562 = vunpack.c.l.b16 %v493
  %v563 = vunpack.c.l.b16 %v494
  %v564 = vunpack.c.l.b16 %v495
  %v565 = vunpack.c.l.b16 %v496
  %v566 = vunpack.c.l.b16 %v497
  %v567 = vunpack.c.l.b16 %v498
  %v568 = vunpack.c.l.b16 %v499
  %v569 = vunpack.c.l.b16 %v500
  %v570 = vunpack.c.l.b16 %v501
  %v571 = vunpack.c.l.b16 %v502
  %v572 = vunpack.c.l.b16 %v503
  %v573 = vunpack.c.l.b16 %v504
  %v574 = vunpack.c.l.b16 %v505
  %v575 = vunpack.c.l.b16 %v506
  %v576 = vunpack.c.l.b16 %v507
  %v577 = vunpack.c.l.b16 %v508
  %v578 = vunpack.c.l.b16 %v509
  %v579 = vunpack.c.l.b16 %v510
  %v580 = vpack.c.b16 %v549, %v548
  %v581 = vpack.c.b16 %v551, %v550
  %v582 = vpack.c.b16 %v553, %v552
  %v583 = vpack.c.b16 %v555, %v554
  %v584 = vpack.c.b16 %v557, %v556
  %v585 = vpack.c.b16 %v559, %v558
  %v586 = vpack.c.b16 %v561, %v560
  %v587 = vpack.c.b16 %v563, %v562
  %v588 = vpack.c.b16 %v565, %v564
  %v589 = vpack.c.b16 %v567, %v566
  %v590 = vpack.c.b16 %v569, %v568
  %v591 = vpack.c.b16 %v571, %v570
  %v592 = vpack.c.b16 %v573, %v572
  %v593 = vpack.c.b16 %v575, %v574
  %v594 = vpack.c.b16 %v577, %v576
  %v595 = vpack.c.b16 %v579, %v578
  %v600 = vunpack.c.l.b16 %v511
  %v601 = vunpack.c.l.b16 %v512
  %v602 = vunpack.c.l.b16 %v513
  %v603 = vunpack.c.l.b16 %v514
  %v604 = vpack.c.b16 %v601, %v600
  %v605 = vpack.c.b16 %v603, %v602
  %v609 = vsel %vm341, %v580, 0
  %v612 = vsel %vm341, %v581, 0
  %v615 = vsel %vm341, %v582, 0
  %v618 = vsel %vm341, %v583, 0
  %v621 = vsel %vm341, %v584, 0
  %v624 = vsel %vm341, %v585, 0
  %v627 = vsel %vm341, %v586, 0
  %v630 = vsel %vm341, %v587, 0
  %v633 = vsel %vm341, %v588, 0
  %v636 = vsel %vm341, %v589, 0
  %v639 = vsel %vm341, %v590, 0
  %v642 = vsel %vm341, %v591, 0
  %v645 = vsel %vm341, %v592, 0
  %v648 = vsel %vm341, %v593, 0
  %v651 = vsel %vm341, %v594, 0
  %v654 = vsel %vm341, %v595, 0
  %656 = vmatpush.bf16.msra.mxu0 0
  %657 = vmatpush.bf16.msra.mxu0 0
  %658 = vmatpush.bf16.msra.mxu0 0
  %659 = vmatpush.bf16.msra.mxu0 0
  %660 = vmatpush.bf16.msra.mxu0 0
  %661 = vmatpush.bf16.msra.mxu0 0
  %662 = vmatpush.bf16.msra.mxu0 %v605
  %663 = vmatpush.bf16.msra.mxu0 %v604
  %664 = vmatmul.bf16.gmra.mxu0 %v609
  %v665 = vpop.f32.mrf.mxu0
  %v666 = vadd.f32 %v515, %v665
  %v667 = vpop.f32.mrf.mxu0
  %v668 = vadd.f32 %v515, %v667
  %669 = vmatmul.bf16.gmra.mxu0 %v612
  %v670 = vpop.f32.mrf.mxu0
  %v671 = vadd.f32 %v515, %v670
  %v672 = vpop.f32.mrf.mxu0
  %v673 = vadd.f32 %v515, %v672
  %674 = vmatmul.bf16.gmra.mxu0 %v615
  %v675 = vpop.f32.mrf.mxu0
  %v676 = vadd.f32 %v515, %v675
  %v677 = vpop.f32.mrf.mxu0
  %v678 = vadd.f32 %v515, %v677
  %679 = vmatmul.bf16.gmra.mxu0 %v618
  %v680 = vpop.f32.mrf.mxu0
  %v681 = vadd.f32 %v515, %v680
  %v682 = vpop.f32.mrf.mxu0
  %v683 = vadd.f32 %v515, %v682
  %684 = vmatmul.bf16.gmra.mxu0 %v621
  %v685 = vpop.f32.mrf.mxu0
  %v686 = vadd.f32 %v515, %v685
  %v687 = vpop.f32.mrf.mxu0
  %v688 = vadd.f32 %v515, %v687
  %689 = vmatmul.bf16.gmra.mxu0 %v624
  %v690 = vpop.f32.mrf.mxu0
  %v691 = vadd.f32 %v515, %v690
  %v692 = vpop.f32.mrf.mxu0
  %v693 = vadd.f32 %v515, %v692
  %694 = vmatmul.bf16.gmra.mxu0 %v627
  %v695 = vpop.f32.mrf.mxu0
  %v696 = vadd.f32 %v515, %v695
  %v697 = vpop.f32.mrf.mxu0
  %v698 = vadd.f32 %v515, %v697
  %699 = vmatmul.bf16.gmra.mxu0 %v630
  %v700 = vpop.f32.mrf.mxu0
  %v701 = vadd.f32 %v515, %v700
  %v702 = vpop.f32.mrf.mxu0
  %v703 = vadd.f32 %v515, %v702
  %704 = vmatmul.bf16.gmra.mxu0 %v633
  %v705 = vpop.f32.mrf.mxu0
  %v706 = vadd.f32 %v515, %v705
  %v707 = vpop.f32.mrf.mxu0
  %v708 = vadd.f32 %v515, %v707
  %709 = vmatmul.bf16.gmra.mxu0 %v636
  %v710 = vpop.f32.mrf.mxu0
  %v711 = vadd.f32 %v515, %v710
  %v712 = vpop.f32.mrf.mxu0
  %v713 = vadd.f32 %v515, %v712
  %714 = vmatmul.bf16.gmra.mxu0 %v639
  %v715 = vpop.f32.mrf.mxu0
  %v716 = vadd.f32 %v515, %v715
  %v717 = vpop.f32.mrf.mxu0
  %v718 = vadd.f32 %v515, %v717
  %719 = vmatmul.bf16.gmra.mxu0 %v642
  %v720 = vpop.f32.mrf.mxu0
  %v721 = vadd.f32 %v515, %v720
  %v722 = vpop.f32.mrf.mxu0
  %v723 = vadd.f32 %v515, %v722
  %724 = vmatmul.bf16.gmra.mxu0 %v645
  %v725 = vpop.f32.mrf.mxu0
  %v726 = vadd.f32 %v515, %v725
  %v727 = vpop.f32.mrf.mxu0
  %v728 = vadd.f32 %v515, %v727
  %729 = vmatmul.bf16.gmra.mxu0 %v648
  %v730 = vpop.f32.mrf.mxu0
  %v731 = vadd.f32 %v515, %v730
  %v732 = vpop.f32.mrf.mxu0
  %v733 = vadd.f32 %v515, %v732
  %734 = vmatmul.bf16.gmra.mxu0 %v651
  %v735 = vpop.f32.mrf.mxu0
  %v736 = vadd.f32 %v515, %v735
  %v737 = vpop.f32.mrf.mxu0
  %v738 = vadd.f32 %v515, %v737
  %739 = vmatmul.bf16.gmra.mxu0 %v654
  %v740 = vpop.f32.mrf.mxu0
  %v741 = vadd.f32 %v515, %v740
  %v742 = vpop.f32.mrf.mxu0
  %v743 = vadd.f32 %v515, %v742
  %744 = vdwg.mxu0
  %v745 = vmax.f32 %v666, 0.0
  %v746 = vmax.f32 %v668, 0.0
  %v747 = vmax.f32 %v671, 0.0
  %v748 = vmax.f32 %v673, 0.0
  %v749 = vmax.f32 %v676, 0.0
  %v750 = vmax.f32 %v678, 0.0
  %v751 = vmax.f32 %v681, 0.0
  %v752 = vmax.f32 %v683, 0.0
  %v753 = vmax.f32 %v686, 0.0
  %v754 = vmax.f32 %v688, 0.0
  %v755 = vmax.f32 %v691, 0.0
  %v756 = vmax.f32 %v693, 0.0
  %v757 = vmax.f32 %v696, 0.0
  %v758 = vmax.f32 %v698, 0.0
  %v759 = vmax.f32 %v701, 0.0
  %v760 = vmax.f32 %v703, 0.0
  %v761 = vmax.f32 %v706, 0.0
  %v762 = vmax.f32 %v708, 0.0
  %v763 = vmax.f32 %v711, 0.0
  %v764 = vmax.f32 %v713, 0.0
  %v765 = vmax.f32 %v716, 0.0
  %v766 = vmax.f32 %v718, 0.0
  %v767 = vmax.f32 %v721, 0.0
  %v768 = vmax.f32 %v723, 0.0
  %v769 = vmax.f32 %v726, 0.0
  %v770 = vmax.f32 %v728, 0.0
  %v771 = vmax.f32 %v731, 0.0
  %v772 = vmax.f32 %v733, 0.0
  %v773 = vmax.f32 %v736, 0.0
  %v774 = vmax.f32 %v738, 0.0
  %v775 = vmax.f32 %v741, 0.0
  %v776 = vmax.f32 %v743, 0.0
  %v777 = vpack.c.bf16 %v746, %v745
  %v778 = vpack.c.bf16 %v748, %v747
  %v779 = vpack.c.bf16 %v750, %v749
  %v780 = vpack.c.bf16 %v752, %v751
  %v781 = vpack.c.bf16 %v754, %v753
  %v782 = vpack.c.bf16 %v756, %v755
  %v783 = vpack.c.bf16 %v758, %v757
  %v784 = vpack.c.bf16 %v760, %v759
  %v785 = vpack.c.bf16 %v762, %v761
  %v786 = vpack.c.bf16 %v764, %v763
  %v787 = vpack.c.bf16 %v766, %v765
  %v788 = vpack.c.bf16 %v768, %v767
  %v789 = vpack.c.bf16 %v770, %v769
  %v790 = vpack.c.bf16 %v772, %v771
  %v791 = vpack.c.bf16 %v774, %v773
  %v792 = vpack.c.bf16 %v776, %v775
  %v793 = vld [vmem:[%s3] sm:$0xf]
  %v794 = vld [vmem:[%s3 + $0x4] sm:$0xf]
  %v795 = vld [vmem:[%s3 + $0x8] sm:$0xf]
  %v796 = vld [vmem:[%s3 + $0xc] sm:$0xf]
  %v797 = vperm.slane %v27, 3
  %v802 = vunpack.c.l.b16 %v793
  %v803 = vunpack.c.l.b16 %v794
  %v804 = vunpack.c.l.b16 %v795
  %v805 = vunpack.c.l.b16 %v796
  %v806 = vpack.c.b16 %v803, %v802
  %v807 = vpack.c.b16 %v805, %v804
  %v811 = vsel %vm341, %v777, 0
  %v814 = vsel %vm341, %v778, 0
  %v817 = vsel %vm341, %v779, 0
  %v820 = vsel %vm341, %v780, 0
  %v823 = vsel %vm341, %v781, 0
  %v826 = vsel %vm341, %v782, 0
  %v829 = vsel %vm341, %v783, 0
  %v832 = vsel %vm341, %v784, 0
  %v835 = vsel %vm341, %v785, 0
  %v838 = vsel %vm341, %v786, 0
  %v841 = vsel %vm341, %v787, 0
  %v844 = vsel %vm341, %v788, 0
  %v847 = vsel %vm341, %v789, 0
  %v850 = vsel %vm341, %v790, 0
  %v853 = vsel %vm341, %v791, 0
  %v856 = vsel %vm341, %v792, 0
  %858 = vmatpush.bf16.msra.mxu0 0
  %859 = vmatpush.bf16.msra.mxu0 0
  %860 = vmatpush.bf16.msra.mxu0 0
  %861 = vmatpush.bf16.msra.mxu0 0
  %862 = vmatpush.bf16.msra.mxu0 0
  %863 = vmatpush.bf16.msra.mxu0 0
  %864 = vmatpush.bf16.msra.mxu0 %v807
  %865 = vmatpush.bf16.msra.mxu0 %v806
  %866 = vmatmul.bf16.gmra.mxu0 %v811
  %v867 = vpop.f32.mrf.mxu0
  %v868 = vadd.f32 %v797, %v867
  %v869 = vpop.f32.mrf.mxu0
  %v870 = vadd.f32 %v797, %v869
  %871 = vmatmul.bf16.gmra.mxu0 %v814
  %v872 = vpop.f32.mrf.mxu0
  %v873 = vadd.f32 %v797, %v872
  %v874 = vpop.f32.mrf.mxu0
  %v875 = vadd.f32 %v797, %v874
  %876 = vmatmul.bf16.gmra.mxu0 %v817
  %v877 = vpop.f32.mrf.mxu0
  %v878 = vadd.f32 %v797, %v877
  %v879 = vpop.f32.mrf.mxu0
  %v880 = vadd.f32 %v797, %v879
  %881 = vmatmul.bf16.gmra.mxu0 %v820
  %v882 = vpop.f32.mrf.mxu0
  %v883 = vadd.f32 %v797, %v882
  %v884 = vpop.f32.mrf.mxu0
  %v885 = vadd.f32 %v797, %v884
  %886 = vmatmul.bf16.gmra.mxu0 %v823
  %v887 = vpop.f32.mrf.mxu0
  %v888 = vadd.f32 %v797, %v887
  %v889 = vpop.f32.mrf.mxu0
  %v890 = vadd.f32 %v797, %v889
  %891 = vmatmul.bf16.gmra.mxu0 %v826
  %v892 = vpop.f32.mrf.mxu0
  %v893 = vadd.f32 %v797, %v892
  %v894 = vpop.f32.mrf.mxu0
  %v895 = vadd.f32 %v797, %v894
  %896 = vmatmul.bf16.gmra.mxu0 %v829
  %v897 = vpop.f32.mrf.mxu0
  %v898 = vadd.f32 %v797, %v897
  %v899 = vpop.f32.mrf.mxu0
  %v900 = vadd.f32 %v797, %v899
  %901 = vmatmul.bf16.gmra.mxu0 %v832
  %v902 = vpop.f32.mrf.mxu0
  %v903 = vadd.f32 %v797, %v902
  %v904 = vpop.f32.mrf.mxu0
  %v905 = vadd.f32 %v797, %v904
  %906 = vmatmul.bf16.gmra.mxu0 %v835
  %v907 = vpop.f32.mrf.mxu0
  %v908 = vadd.f32 %v797, %v907
  %v909 = vpop.f32.mrf.mxu0
  %v910 = vadd.f32 %v797, %v909
  %911 = vmatmul.bf16.gmra.mxu0 %v838
  %v912 = vpop.f32.mrf.mxu0
  %v913 = vadd.f32 %v797, %v912
  %v914 = vpop.f32.mrf.mxu0
  %v915 = vadd.f32 %v797, %v914
  %916 = vmatmul.bf16.gmra.mxu0 %v841
  %v917 = vpop.f32.mrf.mxu0
  %v918 = vadd.f32 %v797, %v917
  %v919 = vpop.f32.mrf.mxu0
  %v920 = vadd.f32 %v797, %v919
  %921 = vmatmul.bf16.gmra.mxu0 %v844
  %v922 = vpop.f32.mrf.mxu0
  %v923 = vadd.f32 %v797, %v922
  %v924 = vpop.f32.mrf.mxu0
  %v925 = vadd.f32 %v797, %v924
  %926 = vmatmul.bf16.gmra.mxu0 %v847
  %v927 = vpop.f32.mrf.mxu0
  %v928 = vadd.f32 %v797, %v927
  %v929 = vpop.f32.mrf.mxu0
  %v930 = vadd.f32 %v797, %v929
  %931 = vmatmul.bf16.gmra.mxu0 %v850
  %v932 = vpop.f32.mrf.mxu0
  %v933 = vadd.f32 %v797, %v932
  %v934 = vpop.f32.mrf.mxu0
  %v935 = vadd.f32 %v797, %v934
  %936 = vmatmul.bf16.gmra.mxu0 %v853
  %v937 = vpop.f32.mrf.mxu0
  %v938 = vadd.f32 %v797, %v937
  %v939 = vpop.f32.mrf.mxu0
  %v940 = vadd.f32 %v797, %v939
  %941 = vmatmul.bf16.gmra.mxu0 %v856
  %v942 = vpop.f32.mrf.mxu0
  %v943 = vadd.f32 %v797, %v942
  %v944 = vpop.f32.mrf.mxu0
  %v945 = vadd.f32 %v797, %v944
  %946 = vdwg.mxu0
  %v947 = vmax.f32 %v868, 0.0
  %v948 = vmax.f32 %v870, 0.0
  %v949 = vmax.f32 %v873, 0.0
  %v950 = vmax.f32 %v875, 0.0
  %v951 = vmax.f32 %v878, 0.0
  %v952 = vmax.f32 %v880, 0.0
  %v953 = vmax.f32 %v883, 0.0
  %v954 = vmax.f32 %v885, 0.0
  %v955 = vmax.f32 %v888, 0.0
  %v956 = vmax.f32 %v890, 0.0
  %v957 = vmax.f32 %v893, 0.0
  %v958 = vmax.f32 %v895, 0.0
  %v959 = vmax.f32 %v898, 0.0
  %v960 = vmax.f32 %v900, 0.0
  %v961 = vmax.f32 %v903, 0.0
  %v962 = vmax.f32 %v905, 0.0
  %v963 = vmax.f32 %v908, 0.0
  %v964 = vmax.f32 %v910, 0.0
  %v965 = vmax.f32 %v913, 0.0
  %v966 = vmax.f32 %v915, 0.0
  %v967 = vmax.f32 %v918, 0.0
  %v968 = vmax.f32 %v920, 0.0
  %v969 = vmax.f32 %v923, 0.0
  %v970 = vmax.f32 %v925, 0.0
  %v971 = vmax.f32 %v928, 0.0
  %v972 = vmax.f32 %v930, 0.0
  %v973 = vmax.f32 %v933, 0.0
  %v974 = vmax.f32 %v935, 0.0
  %v975 = vmax.f32 %v938, 0.0
  %v976 = vmax.f32 %v940, 0.0
  %v977 = vmax.f32 %v943, 0.0
  %v978 = vmax.f32 %v945, 0.0
  %v979 = vpack.c.bf16 %v947, %v947
  %v980 = vpack.c.bf16 %v948, %v948
  %v981 = vpack.c.bf16 %v949, %v949
  %v982 = vpack.c.bf16 %v950, %v950
  %v983 = vpack.c.bf16 %v951, %v951
  %v984 = vpack.c.bf16 %v952, %v952
  %v985 = vpack.c.bf16 %v953, %v953
  %v986 = vpack.c.bf16 %v954, %v954
  %v987 = vpack.c.bf16 %v955, %v955
  %v988 = vpack.c.bf16 %v956, %v956
  %v989 = vpack.c.bf16 %v957, %v957
  %v990 = vpack.c.bf16 %v958, %v958
  %v991 = vpack.c.bf16 %v959, %v959
  %v992 = vpack.c.bf16 %v960, %v960
  %v993 = vpack.c.bf16 %v961, %v961
  %v994 = vpack.c.bf16 %v962, %v962
  %v995 = vpack.c.bf16 %v963, %v963
  %v996 = vpack.c.bf16 %v964, %v964
  %v997 = vpack.c.bf16 %v965, %v965
  %v998 = vpack.c.bf16 %v966, %v966
  %v999 = vpack.c.bf16 %v967, %v967
  %v1000 = vpack.c.bf16 %v968, %v968
  %v1001 = vpack.c.bf16 %v969, %v969
  %v1002 = vpack.c.bf16 %v970, %v970
  %v1003 = vpack.c.bf16 %v971, %v971
  %v1004 = vpack.c.bf16 %v972, %v972
  %v1005 = vpack.c.bf16 %v973, %v973
  %v1006 = vpack.c.bf16 %v974, %v974
  %v1007 = vpack.c.bf16 %v975, %v975
  %v1008 = vpack.c.bf16 %v976, %v976
  %v1009 = vpack.c.bf16 %v977, %v977
  %v1010 = vpack.c.bf16 %v978, %v978
  %v1043 = vunpack.c.l.b16 %v979
  %v1044 = vunpack.c.l.b16 %v980
  %v1045 = vunpack.c.l.b16 %v981
  %v1046 = vunpack.c.l.b16 %v982
  %v1047 = vunpack.c.l.b16 %v983
  %v1048 = vunpack.c.l.b16 %v984
  %v1049 = vunpack.c.l.b16 %v985
  %v1050 = vunpack.c.l.b16 %v986
  %v1051 = vunpack.c.l.b16 %v987
  %v1052 = vunpack.c.l.b16 %v988
  %v1053 = vunpack.c.l.b16 %v989
  %v1054 = vunpack.c.l.b16 %v990
  %v1055 = vunpack.c.l.b16 %v991
  %v1056 = vunpack.c.l.b16 %v992
  %v1057 = vunpack.c.l.b16 %v993
  %v1058 = vunpack.c.l.b16 %v994
  %v1059 = vunpack.c.l.b16 %v995
  %v1060 = vunpack.c.l.b16 %v996
  %v1061 = vunpack.c.l.b16 %v997
  %v1062 = vunpack.c.l.b16 %v998
  %v1063 = vunpack.c.l.b16 %v999
  %v1064 = vunpack.c.l.b16 %v1000
  %v1065 = vunpack.c.l.b16 %v1001
  %v1066 = vunpack.c.l.b16 %v1002
  %v1067 = vunpack.c.l.b16 %v1003
  %v1068 = vunpack.c.l.b16 %v1004
  %v1069 = vunpack.c.l.b16 %v1005
  %v1070 = vunpack.c.l.b16 %v1006
  %v1071 = vunpack.c.l.b16 %v1007
  %v1072 = vunpack.c.l.b16 %v1008
  %v1073 = vunpack.c.l.b16 %v1009
  %v1074 = vunpack.c.l.b16 %v1010
  %v1075 = vpack.c.b16 %v1044, %v1043
  %v1076 = vpack.c.b16 %v1046, %v1045
  %v1077 = vpack.c.b16 %v1048, %v1047
  %v1078 = vpack.c.b16 %v1050, %v1049
  %v1079 = vpack.c.b16 %v1052, %v1051
  %v1080 = vpack.c.b16 %v1054, %v1053
  %v1081 = vpack.c.b16 %v1056, %v1055
  %v1082 = vpack.c.b16 %v1058, %v1057
  %v1083 = vpack.c.b16 %v1060, %v1059
  %v1084 = vpack.c.b16 %v1062, %v1061
  %v1085 = vpack.c.b16 %v1064, %v1063
  %v1086 = vpack.c.b16 %v1066, %v1065
  %v1087 = vpack.c.b16 %v1068, %v1067
  %v1088 = vpack.c.b16 %v1070, %v1069
  %v1089 = vpack.c.b16 %v1072, %v1071
  %v1090 = vpack.c.b16 %v1074, %v1073
  %1091 = vrot.lane.b32.xlu0 %v1075, 32
  %v1092 = vpop.permute.xlu0 %1091
  %1093 = vrot.lane.b32.xlu0 %v1076, 32
  %v1094 = vpop.permute.xlu0 %1093
  %1095 = vrot.lane.b32.xlu0 %v1077, 32
  %v1096 = vpop.permute.xlu0 %1095
  %1097 = vrot.lane.b32.xlu0 %v1078, 32
  %v1098 = vpop.permute.xlu0 %1097
  %1099 = vrot.lane.b32.xlu0 %v1079, 32
  %v1100 = vpop.permute.xlu0 %1099
  %1101 = vrot.lane.b32.xlu0 %v1080, 32
  %v1102 = vpop.permute.xlu0 %1101
  %1103 = vrot.lane.b32.xlu0 %v1081, 32
  %v1104 = vpop.permute.xlu0 %1103
  %1105 = vrot.lane.b32.xlu0 %v1082, 32
  %v1106 = vpop.permute.xlu0 %1105
  %1107 = vrot.lane.b32.xlu0 %v1083, 32
  %v1108 = vpop.permute.xlu0 %1107
  %1109 = vrot.lane.b32.xlu0 %v1084, 32
  %v1110 = vpop.permute.xlu0 %1109
  %1111 = vrot.lane.b32.xlu0 %v1085, 32
  %v1112 = vpop.permute.xlu0 %1111
  %1113 = vrot.lane.b32.xlu0 %v1086, 32
  %v1114 = vpop.permute.xlu0 %1113
  %1115 = vrot.lane.b32.xlu0 %v1087, 32
  %v1116 = vpop.permute.xlu0 %1115
  %1117 = vrot.lane.b32.xlu0 %v1088, 32
  %v1118 = vpop.permute.xlu0 %1117
  %1119 = vrot.lane.b32.xlu0 %v1089, 32
  %v1120 = vpop.permute.xlu0 %1119
  %1121 = vrot.lane.b32.xlu0 %v1090, 32
  %v1122 = vpop.permute.xlu0 %1121
  %v1124 = vsel %vm341, %v580, %v1092
  %v1126 = vsel %vm341, %v581, %v1094
  %v1128 = vsel %vm341, %v582, %v1096
  %v1130 = vsel %vm341, %v583, %v1098
  %v1132 = vsel %vm341, %v584, %v1100
  %v1134 = vsel %vm341, %v585, %v1102
  %v1136 = vsel %vm341, %v586, %v1104
  %v1138 = vsel %vm341, %v587, %v1106
  %v1140 = vsel %vm341, %v588, %v1108
  %v1142 = vsel %vm341, %v589, %v1110
  %v1144 = vsel %vm341, %v590, %v1112
  %v1146 = vsel %vm341, %v591, %v1114
  %v1148 = vsel %vm341, %v592, %v1116
  %v1150 = vsel %vm341, %v593, %v1118
  %v1152 = vsel %vm341, %v594, %v1120
  %v1154 = vsel %vm341, %v595, %v1122
  %v1155 = vld [vmem:[%s5] sm:$0xf]
  %v1156 = vld [vmem:[%s5 + $0x4] sm:$0xf]
  %v1157 = vld [vmem:[%s5 + $0x8] sm:$0xf]
  %v1158 = vld [vmem:[%s5 + $0xc] sm:$0xf]
  %v1159 = vld [vmem:[%s5 + $0x10] sm:$0xf]
  %v1160 = vld [vmem:[%s5 + $0x14] sm:$0xf]
  %v1161 = vld [vmem:[%s5 + $0x18] sm:$0xf]
  %v1162 = vld [vmem:[%s5 + $0x1c] sm:$0xf]
  %v1163 = vperm.slane %v27, 4
  %v1172 = vunpack.c.l.b16 %v1155
  %v1173 = vunpack.c.l.b16 %v1156
  %v1174 = vunpack.c.l.b16 %v1157
  %v1175 = vunpack.c.l.b16 %v1158
  %v1176 = vunpack.c.l.b16 %v1159
  %v1177 = vunpack.c.l.b16 %v1160
  %v1178 = vunpack.c.l.b16 %v1161
  %v1179 = vunpack.c.l.b16 %v1162
  %v1180 = vpack.c.b16 %v1173, %v1172
  %v1181 = vpack.c.b16 %v1175, %v1174
  %v1182 = vpack.c.b16 %v1177, %v1176
  %v1183 = vpack.c.b16 %v1179, %v1178
  %vm1188 = vcmask 523264
  %v1189 = vsel %vm1188, %v1124, 0
  %v1191 = vsel %vm1188, %v1126, 0
  %v1193 = vsel %vm1188, %v1128, 0
  %v1195 = vsel %vm1188, %v1130, 0
  %v1197 = vsel %vm1188, %v1132, 0
  %v1199 = vsel %vm1188, %v1134, 0
  %v1201 = vsel %vm1188, %v1136, 0
  %v1203 = vsel %vm1188, %v1138, 0
  %v1205 = vsel %vm1188, %v1140, 0
  %v1207 = vsel %vm1188, %v1142, 0
  %v1209 = vsel %vm1188, %v1144, 0
  %v1211 = vsel %vm1188, %v1146, 0
  %v1213 = vsel %vm1188, %v1148, 0
  %v1215 = vsel %vm1188, %v1150, 0
  %v1217 = vsel %vm1188, %v1152, 0
  %v1219 = vsel %vm1188, %v1154, 0
  %1221 = vmatpush.bf16.msra.mxu0 0
  %1222 = vmatpush.bf16.msra.mxu0 0
  %1223 = vmatpush.bf16.msra.mxu0 0
  %1224 = vmatpush.bf16.msra.mxu0 0
  %1225 = vmatpush.bf16.msra.mxu0 %v1183
  %1226 = vmatpush.bf16.msra.mxu0 %v1182
  %1227 = vmatpush.bf16.msra.mxu0 %v1181
  %1228 = vmatpush.bf16.msra.mxu0 %v1180
  %1229 = vmatmul.bf16.gmra.mxu0 %v1189
  %v1230 = vpop.f32.mrf.mxu0
  %v1231 = vadd.f32 %v1163, %v1230
  %v1232 = vpop.f32.mrf.mxu0
  %v1233 = vadd.f32 %v1163, %v1232
  %1234 = vmatmul.bf16.gmra.mxu0 %v1191
  %v1235 = vpop.f32.mrf.mxu0
  %v1236 = vadd.f32 %v1163, %v1235
  %v1237 = vpop.f32.mrf.mxu0
  %v1238 = vadd.f32 %v1163, %v1237
  %1239 = vmatmul.bf16.gmra.mxu0 %v1193
  %v1240 = vpop.f32.mrf.mxu0
  %v1241 = vadd.f32 %v1163, %v1240
  %v1242 = vpop.f32.mrf.mxu0
  %v1243 = vadd.f32 %v1163, %v1242
  %1244 = vmatmul.bf16.gmra.mxu0 %v1195
  %v1245 = vpop.f32.mrf.mxu0
  %v1246 = vadd.f32 %v1163, %v1245
  %v1247 = vpop.f32.mrf.mxu0
  %v1248 = vadd.f32 %v1163, %v1247
  %1249 = vmatmul.bf16.gmra.mxu0 %v1197
  %v1250 = vpop.f32.mrf.mxu0
  %v1251 = vadd.f32 %v1163, %v1250
  %v1252 = vpop.f32.mrf.mxu0
  %v1253 = vadd.f32 %v1163, %v1252
  %1254 = vmatmul.bf16.gmra.mxu0 %v1199
  %v1255 = vpop.f32.mrf.mxu0
  %v1256 = vadd.f32 %v1163, %v1255
  %v1257 = vpop.f32.mrf.mxu0
  %v1258 = vadd.f32 %v1163, %v1257
  %1259 = vmatmul.bf16.gmra.mxu0 %v1201
  %v1260 = vpop.f32.mrf.mxu0
  %v1261 = vadd.f32 %v1163, %v1260
  %v1262 = vpop.f32.mrf.mxu0
  %v1263 = vadd.f32 %v1163, %v1262
  %1264 = vmatmul.bf16.gmra.mxu0 %v1203
  %v1265 = vpop.f32.mrf.mxu0
  %v1266 = vadd.f32 %v1163, %v1265
  %v1267 = vpop.f32.mrf.mxu0
  %v1268 = vadd.f32 %v1163, %v1267
  %1269 = vmatmul.bf16.gmra.mxu0 %v1205
  %v1270 = vpop.f32.mrf.mxu0
  %v1271 = vadd.f32 %v1163, %v1270
  %v1272 = vpop.f32.mrf.mxu0
  %v1273 = vadd.f32 %v1163, %v1272
  %1274 = vmatmul.bf16.gmra.mxu0 %v1207
  %v1275 = vpop.f32.mrf.mxu0
  %v1276 = vadd.f32 %v1163, %v1275
  %v1277 = vpop.f32.mrf.mxu0
  %v1278 = vadd.f32 %v1163, %v1277
  %1279 = vmatmul.bf16.gmra.mxu0 %v1209
  %v1280 = vpop.f32.mrf.mxu0
  %v1281 = vadd.f32 %v1163, %v1280
  %v1282 = vpop.f32.mrf.mxu0
  %v1283 = vadd.f32 %v1163, %v1282
  %1284 = vmatmul.bf16.gmra.mxu0 %v1211
  %v1285 = vpop.f32.mrf.mxu0
  %v1286 = vadd.f32 %v1163, %v1285
  %v1287 = vpop.f32.mrf.mxu0
  %v1288 = vadd.f32 %v1163, %v1287
  %1289 = vmatmul.bf16.gmra.mxu0 %v1213
  %v1290 = vpop.f32.mrf.mxu0
  %v1291 = vadd.f32 %v1163, %v1290
  %v1292 = vpop.f32.mrf.mxu0
  %v1293 = vadd.f32 %v1163, %v1292
  %1294 = vmatmul.bf16.gmra.mxu0 %v1215
  %v1295 = vpop.f32.mrf.mxu0
  %v1296 = vadd.f32 %v1163, %v1295
  %v1297 = vpop.f32.mrf.mxu0
  %v1298 = vadd.f32 %v1163, %v1297
  %1299 = vmatmul.bf16.gmra.mxu0 %v1217
  %v1300 = vpop.f32.mrf.mxu0
  %v1301 = vadd.f32 %v1163, %v1300
  %v1302 = vpop.f32.mrf.mxu0
  %v1303 = vadd.f32 %v1163, %v1302
  %1304 = vmatmul.bf16.gmra.mxu0 %v1219
  %v1305 = vpop.f32.mrf.mxu0
  %v1306 = vadd.f32 %v1163, %v1305
  %v1307 = vpop.f32.mrf.mxu0
  %v1308 = vadd.f32 %v1163, %v1307
  %1309 = vdwg.mxu0
  %vm1310 = vcmp.ge.f32.partialorder %v1231, 0.0
  %vm1311 = vcmp.ge.f32.partialorder %v1233, 0.0
  %vm1312 = vcmp.ge.f32.partialorder %v1236, 0.0
  %vm1313 = vcmp.ge.f32.partialorder %v1238, 0.0
  %vm1314 = vcmp.ge.f32.partialorder %v1241, 0.0
  %vm1315 = vcmp.ge.f32.partialorder %v1243, 0.0
  %vm1316 = vcmp.ge.f32.partialorder %v1246, 0.0
  %vm1317 = vcmp.ge.f32.partialorder %v1248, 0.0
  %vm1318 = vcmp.ge.f32.partialorder %v1251, 0.0
  %vm1319 = vcmp.ge.f32.partialorder %v1253, 0.0
  %vm1320 = vcmp.ge.f32.partialorder %v1256, 0.0
  %vm1321 = vcmp.ge.f32.partialorder %v1258, 0.0
  %vm1322 = vcmp.ge.f32.partialorder %v1261, 0.0
  %vm1323 = vcmp.ge.f32.partialorder %v1263, 0.0
  %vm1324 = vcmp.ge.f32.partialorder %v1266, 0.0
  %vm1325 = vcmp.ge.f32.partialorder %v1268, 0.0
  %vm1326 = vcmp.ge.f32.partialorder %v1271, 0.0
  %vm1327 = vcmp.ge.f32.partialorder %v1273, 0.0
  %vm1328 = vcmp.ge.f32.partialorder %v1276, 0.0
  %vm1329 = vcmp.ge.f32.partialorder %v1278, 0.0
  %vm1330 = vcmp.ge.f32.partialorder %v1281, 0.0
  %vm1331 = vcmp.ge.f32.partialorder %v1283, 0.0
  %vm1332 = vcmp.ge.f32.partialorder %v1286, 0.0
  %vm1333 = vcmp.ge.f32.partialorder %v1288, 0.0
  %vm1334 = vcmp.ge.f32.partialorder %v1291, 0.0
  %vm1335 = vcmp.ge.f32.partialorder %v1293, 0.0
  %vm1336 = vcmp.ge.f32.partialorder %v1296, 0.0
  %vm1337 = vcmp.ge.f32.partialorder %v1298, 0.0
  %vm1338 = vcmp.ge.f32.partialorder %v1301, 0.0
  %vm1339 = vcmp.ge.f32.partialorder %v1303, 0.0
  %vm1340 = vcmp.ge.f32.partialorder %v1306, 0.0
  %vm1341 = vcmp.ge.f32.partialorder %v1308, 0.0
  %v1342 = vperm.slane %v27, 7
  %v1343 = vmul.f32 %v1231, %v1342
  %v1344 = vmul.f32 %v1233, %v1342
  %v1345 = vmul.f32 %v1236, %v1342
  %v1346 = vmul.f32 %v1238, %v1342
  %v1347 = vmul.f32 %v1241, %v1342
  %v1348 = vmul.f32 %v1243, %v1342
  %v1349 = vmul.f32 %v1246, %v1342
  %v1350 = vmul.f32 %v1248, %v1342
  %v1351 = vmul.f32 %v1251, %v1342
  %v1352 = vmul.f32 %v1253, %v1342
  %v1353 = vmul.f32 %v1256, %v1342
  %v1354 = vmul.f32 %v1258, %v1342
  %v1355 = vmul.f32 %v1261, %v1342
  %v1356 = vmul.f32 %v1263, %v1342
  %v1357 = vmul.f32 %v1266, %v1342
  %v1358 = vmul.f32 %v1268, %v1342
  %v1359 = vmul.f32 %v1271, %v1342
  %v1360 = vmul.f32 %v1273, %v1342
  %v1361 = vmul.f32 %v1276, %v1342
  %v1362 = vmul.f32 %v1278, %v1342
  %v1363 = vmul.f32 %v1281, %v1342
  %v1364 = vmul.f32 %v1283, %v1342
  %v1365 = vmul.f32 %v1286, %v1342
  %v1366 = vmul.f32 %v1288, %v1342
  %v1367 = vmul.f32 %v1291, %v1342
  %v1368 = vmul.f32 %v1293, %v1342
  %v1369 = vmul.f32 %v1296, %v1342
  %v1370 = vmul.f32 %v1298, %v1342
  %v1371 = vmul.f32 %v1301, %v1342
  %v1372 = vmul.f32 %v1303, %v1342
  %v1373 = vmul.f32 %v1306, %v1342
  %v1374 = vmul.f32 %v1308, %v1342
  %v1375 = vsel %vm1310, %v1231, %v1343
  %v1376 = vsel %vm1311, %v1233, %v1344
  %v1377 = vsel %vm1312, %v1236, %v1345
  %v1378 = vsel %vm1313, %v1238, %v1346
  %v1379 = vsel %vm1314, %v1241, %v1347
  %v1380 = vsel %vm1315, %v1243, %v1348
  %v1381 = vsel %vm1316, %v1246, %v1349
  %v1382 = vsel %vm1317, %v1248, %v1350
  %v1383 = vsel %vm1318, %v1251, %v1351
  %v1384 = vsel %vm1319, %v1253, %v1352
  %v1385 = vsel %vm1320, %v1256, %v1353
  %v1386 = vsel %vm1321, %v1258, %v1354
  %v1387 = vsel %vm1322, %v1261, %v1355
  %v1388 = vsel %vm1323, %v1263, %v1356
  %v1389 = vsel %vm1324, %v1266, %v1357
  %v1390 = vsel %vm1325, %v1268, %v1358
  %v1391 = vsel %vm1326, %v1271, %v1359
  %v1392 = vsel %vm1327, %v1273, %v1360
  %v1393 = vsel %vm1328, %v1276, %v1361
  %v1394 = vsel %vm1329, %v1278, %v1362
  %v1395 = vsel %vm1330, %v1281, %v1363
  %v1396 = vsel %vm1331, %v1283, %v1364
  %v1397 = vsel %vm1332, %v1286, %v1365
  %v1398 = vsel %vm1333, %v1288, %v1366
  %v1399 = vsel %vm1334, %v1291, %v1367
  %v1400 = vsel %vm1335, %v1293, %v1368
  %v1401 = vsel %vm1336, %v1296, %v1369
  %v1402 = vsel %vm1337, %v1298, %v1370
  %v1403 = vsel %vm1338, %v1301, %v1371
  %v1404 = vsel %vm1339, %v1303, %v1372
  %v1405 = vsel %vm1340, %v1306, %v1373
  %v1406 = vsel %vm1341, %v1308, %v1374
  %v1407 = vadd.f32 %v400, %v1375
  %v1408 = vadd.f32 %v402, %v1376
  %v1409 = vadd.f32 %v405, %v1377
  %v1410 = vadd.f32 %v407, %v1378
  %v1411 = vadd.f32 %v410, %v1379
  %v1412 = vadd.f32 %v412, %v1380
  %v1413 = vadd.f32 %v415, %v1381
  %v1414 = vadd.f32 %v417, %v1382
  %v1415 = vadd.f32 %v420, %v1383
  %v1416 = vadd.f32 %v422, %v1384
  %v1417 = vadd.f32 %v425, %v1385
  %v1418 = vadd.f32 %v427, %v1386
  %v1419 = vadd.f32 %v430, %v1387
  %v1420 = vadd.f32 %v432, %v1388
  %v1421 = vadd.f32 %v435, %v1389
  %v1422 = vadd.f32 %v437, %v1390
  %v1423 = vadd.f32 %v440, %v1391
  %v1424 = vadd.f32 %v442, %v1392
  %v1425 = vadd.f32 %v445, %v1393
  %v1426 = vadd.f32 %v447, %v1394
  %v1427 = vadd.f32 %v450, %v1395
  %v1428 = vadd.f32 %v452, %v1396
  %v1429 = vadd.f32 %v455, %v1397
  %v1430 = vadd.f32 %v457, %v1398
  %v1431 = vadd.f32 %v460, %v1399
  %v1432 = vadd.f32 %v462, %v1400
  %v1433 = vadd.f32 %v465, %v1401
  %v1434 = vadd.f32 %v467, %v1402
  %v1435 = vadd.f32 %v470, %v1403
  %v1436 = vadd.f32 %v472, %v1404
  %v1437 = vadd.f32 %v475, %v1405
  %v1438 = vadd.f32 %v477, %v1406
  %v1439 = vmul.f32 %v1407, %v1407
  %v1440 = vmul.f32 %v1408, %v1408
  %v1441 = vmul.f32 %v1409, %v1409
  %v1442 = vmul.f32 %v1410, %v1410
  %v1443 = vmul.f32 %v1411, %v1411
  %v1444 = vmul.f32 %v1412, %v1412
  %v1445 = vmul.f32 %v1413, %v1413
  %v1446 = vmul.f32 %v1414, %v1414
  %v1447 = vmul.f32 %v1415, %v1415
  %v1448 = vmul.f32 %v1416, %v1416
  %v1449 = vmul.f32 %v1417, %v1417
  %v1450 = vmul.f32 %v1418, %v1418
  %v1451 = vmul.f32 %v1419, %v1419
  %v1452 = vmul.f32 %v1420, %v1420
  %v1453 = vmul.f32 %v1421, %v1421
  %v1454 = vmul.f32 %v1422, %v1422
  %v1455 = vmul.f32 %v1423, %v1423
  %v1456 = vmul.f32 %v1424, %v1424
  %v1457 = vmul.f32 %v1425, %v1425
  %v1458 = vmul.f32 %v1426, %v1426
  %v1459 = vmul.f32 %v1427, %v1427
  %v1460 = vmul.f32 %v1428, %v1428
  %v1461 = vmul.f32 %v1429, %v1429
  %v1462 = vmul.f32 %v1430, %v1430
  %v1463 = vmul.f32 %v1431, %v1431
  %v1464 = vmul.f32 %v1432, %v1432
  %v1465 = vmul.f32 %v1433, %v1433
  %v1466 = vmul.f32 %v1434, %v1434
  %v1467 = vmul.f32 %v1435, %v1435
  %v1468 = vmul.f32 %v1436, %v1436
  %v1469 = vmul.f32 %v1437, %v1437
  %v1470 = vmul.f32 %v1438, %v1438
  %v1471 = vperm.slane %v27, 6
  %v1472 = vmul.f32 %v1439, %v1471
  %v1473 = vmul.f32 %v1440, %v1471
  %v1474 = vmul.f32 %v1441, %v1471
  %v1475 = vmul.f32 %v1442, %v1471
  %v1476 = vmul.f32 %v1443, %v1471
  %v1477 = vmul.f32 %v1444, %v1471
  %v1478 = vmul.f32 %v1445, %v1471
  %v1479 = vmul.f32 %v1446, %v1471
  %v1480 = vmul.f32 %v1447, %v1471
  %v1481 = vmul.f32 %v1448, %v1471
  %v1482 = vmul.f32 %v1449, %v1471
  %v1483 = vmul.f32 %v1450, %v1471
  %v1484 = vmul.f32 %v1451, %v1471
  %v1485 = vmul.f32 %v1452, %v1471
  %v1486 = vmul.f32 %v1453, %v1471
  %v1487 = vmul.f32 %v1454, %v1471
  %v1488 = vmul.f32 %v1455, %v1471
  %v1489 = vmul.f32 %v1456, %v1471
  %v1490 = vmul.f32 %v1457, %v1471
  %v1491 = vmul.f32 %v1458, %v1471
  %v1492 = vmul.f32 %v1459, %v1471
  %v1493 = vmul.f32 %v1460, %v1471
  %v1494 = vmul.f32 %v1461, %v1471
  %v1495 = vmul.f32 %v1462, %v1471
  %v1496 = vmul.f32 %v1463, %v1471
  %v1497 = vmul.f32 %v1464, %v1471
  %v1498 = vmul.f32 %v1465, %v1471
  %v1499 = vmul.f32 %v1466, %v1471
  %v1500 = vmul.f32 %v1467, %v1471
  %v1501 = vmul.f32 %v1468, %v1471
  %v1502 = vmul.f32 %v1469, %v1471
  %v1503 = vmul.f32 %v1470, %v1471
  %1504 = vadd.xlane.f32.xlu0 %v1472
  %v1505 = vpop.xlane.xlu0 %1504
  %1506 = vadd.xlane.f32.xlu0 %v1473
  %v1507 = vpop.xlane.xlu0 %1506
  %1508 = vadd.xlane.f32.xlu0 %v1474
  %v1509 = vpop.xlane.xlu0 %1508
  %1510 = vadd.xlane.f32.xlu0 %v1475
  %v1511 = vpop.xlane.xlu0 %1510
  %1512 = vadd.xlane.f32.xlu0 %v1476
  %v1513 = vpop.xlane.xlu0 %1512
  %1514 = vadd.xlane.f32.xlu0 %v1477
  %v1515 = vpop.xlane.xlu0 %1514
  %1516 = vadd.xlane.f32.xlu0 %v1478
  %v1517 = vpop.xlane.xlu0 %1516
  %1518 = vadd.xlane.f32.xlu0 %v1479
  %v1519 = vpop.xlane.xlu0 %1518
  %1520 = vadd.xlane.f32.xlu0 %v1480
  %v1521 = vpop.xlane.xlu0 %1520
  %1522 = vadd.xlane.f32.xlu0 %v1481
  %v1523 = vpop.xlane.xlu0 %1522
  %1524 = vadd.xlane.f32.xlu0 %v1482
  %v1525 = vpop.xlane.xlu0 %1524
  %1526 = vadd.xlane.f32.xlu0 %v1483
  %v1527 = vpop.xlane.xlu0 %1526
  %1528 = vadd.xlane.f32.xlu0 %v1484
  %v1529 = vpop.xlane.xlu0 %1528
  %1530 = vadd.xlane.f32.xlu0 %v1485
  %v1531 = vpop.xlane.xlu0 %1530
  %1532 = vadd.xlane.f32.xlu0 %v1486
  %v1533 = vpop.xlane.xlu0 %1532
  %1534 = vadd.xlane.f32.xlu0 %v1487
  %v1535 = vpop.xlane.xlu0 %1534
  %1536 = vadd.xlane.f32.xlu0 %v1488
  %v1537 = vpop.xlane.xlu0 %1536
  %1538 = vadd.xlane.f32.xlu0 %v1489
  %v1539 = vpop.xlane.xlu0 %1538
  %1540 = vadd.xlane.f32.xlu0 %v1490
  %v1541 = vpop.xlane.xlu0 %1540
  %1542 = vadd.xlane.f32.xlu0 %v1491
  %v1543 = vpop.xlane.xlu0 %1542
  %1544 = vadd.xlane.f32.xlu0 %v1492
  %v1545 = vpop.xlane.xlu0 %1544
  %1546 = vadd.xlane.f32.xlu0 %v1493
  %v1547 = vpop.xlane.xlu0 %1546
  %1548 = vadd.xlane.f32.xlu0 %v1494
  %v1549 = vpop.xlane.xlu0 %1548
  %1550 = vadd.xlane.f32.xlu0 %v1495
  %v1551 = vpop.xlane.xlu0 %1550
  %1552 = vadd.xlane.f32.xlu0 %v1496
  %v1553 = vpop.xlane.xlu0 %1552
  %1554 = vadd.xlane.f32.xlu0 %v1497
  %v1555 = vpop.xlane.xlu0 %1554
  %1556 = vadd.xlane.f32.xlu0 %v1498
  %v1557 = vpop.xlane.xlu0 %1556
  %1558 = vadd.xlane.f32.xlu0 %v1499
  %v1559 = vpop.xlane.xlu0 %1558
  %1560 = vadd.xlane.f32.xlu0 %v1500
  %v1561 = vpop.xlane.xlu0 %1560
  %1562 = vadd.xlane.f32.xlu0 %v1501
  %v1563 = vpop.xlane.xlu0 %1562
  %1564 = vadd.xlane.f32.xlu0 %v1502
  %v1565 = vpop.xlane.xlu0 %1564
  %1566 = vadd.xlane.f32.xlu0 %v1503
  %v1567 = vpop.xlane.xlu0 %1566
  %v1568 = vadd.f32 %v1505, 1e-12
  %v1569 = vadd.f32 %v1507, 1e-12
  %v1570 = vadd.f32 %v1509, 1e-12
  %v1571 = vadd.f32 %v1511, 1e-12
  %v1572 = vadd.f32 %v1513, 1e-12
  %v1573 = vadd.f32 %v1515, 1e-12
  %v1574 = vadd.f32 %v1517, 1e-12
  %v1575 = vadd.f32 %v1519, 1e-12
  %v1576 = vadd.f32 %v1521, 1e-12
  %v1577 = vadd.f32 %v1523, 1e-12
  %v1578 = vadd.f32 %v1525, 1e-12
  %v1579 = vadd.f32 %v1527, 1e-12
  %v1580 = vadd.f32 %v1529, 1e-12
  %v1581 = vadd.f32 %v1531, 1e-12
  %v1582 = vadd.f32 %v1533, 1e-12
  %v1583 = vadd.f32 %v1535, 1e-12
  %v1584 = vadd.f32 %v1537, 1e-12
  %v1585 = vadd.f32 %v1539, 1e-12
  %v1586 = vadd.f32 %v1541, 1e-12
  %v1587 = vadd.f32 %v1543, 1e-12
  %v1588 = vadd.f32 %v1545, 1e-12
  %v1589 = vadd.f32 %v1547, 1e-12
  %v1590 = vadd.f32 %v1549, 1e-12
  %v1591 = vadd.f32 %v1551, 1e-12
  %v1592 = vadd.f32 %v1553, 1e-12
  %v1593 = vadd.f32 %v1555, 1e-12
  %v1594 = vadd.f32 %v1557, 1e-12
  %v1595 = vadd.f32 %v1559, 1e-12
  %v1596 = vadd.f32 %v1561, 1e-12
  %v1597 = vadd.f32 %v1563, 1e-12
  %v1598 = vadd.f32 %v1565, 1e-12
  %v1599 = vadd.f32 %v1567, 1e-12
  %v1600 = vrsqrt.pop %v1568
  %v1601 = vmul.f32 %v1600, %v1568
  %v1602 = vmul.f32 %v1601, %v1600
  %v1603 = vmul.f32 0.5, %v1602
  %v1604 = vsub.f32 1.5, %v1603
  %v1605 = vmul.f32 %v1600, %v1604
  %vm1606 = vweird.f32 %v1568
  %vm1607 = vweird.f32 %v1600
  %vm1608 = vmor %vm1606, %vm1607
  %v1609 = vsel %vm1608, %v1600, %v1605
  %v1610 = vrsqrt.pop %v1569
  %v1611 = vmul.f32 %v1610, %v1569
  %v1612 = vmul.f32 %v1611, %v1610
  %v1613 = vmul.f32 0.5, %v1612
  %v1614 = vsub.f32 1.5, %v1613
  %v1615 = vmul.f32 %v1610, %v1614
  %vm1616 = vweird.f32 %v1569
  %vm1617 = vweird.f32 %v1610
  %vm1618 = vmor %vm1616, %vm1617
  %v1619 = vsel %vm1618, %v1610, %v1615
  %v1620 = vrsqrt.pop %v1570
  %v1621 = vmul.f32 %v1620, %v1570
  %v1622 = vmul.f32 %v1621, %v1620
  %v1623 = vmul.f32 0.5, %v1622
  %v1624 = vsub.f32 1.5, %v1623
  %v1625 = vmul.f32 %v1620, %v1624
  %vm1626 = vweird.f32 %v1570
  %vm1627 = vweird.f32 %v1620
  %vm1628 = vmor %vm1626, %vm1627
  %v1629 = vsel %vm1628, %v1620, %v1625
  %v1630 = vrsqrt.pop %v1571
  %v1631 = vmul.f32 %v1630, %v1571
  %v1632 = vmul.f32 %v1631, %v1630
  %v1633 = vmul.f32 0.5, %v1632
  %v1634 = vsub.f32 1.5, %v1633
  %v1635 = vmul.f32 %v1630, %v1634
  %vm1636 = vweird.f32 %v1571
  %vm1637 = vweird.f32 %v1630
  %vm1638 = vmor %vm1636, %vm1637
  %v1639 = vsel %vm1638, %v1630, %v1635
  %v1640 = vrsqrt.pop %v1572
  %v1641 = vmul.f32 %v1640, %v1572
  %v1642 = vmul.f32 %v1641, %v1640
  %v1643 = vmul.f32 0.5, %v1642
  %v1644 = vsub.f32 1.5, %v1643
  %v1645 = vmul.f32 %v1640, %v1644
  %vm1646 = vweird.f32 %v1572
  %vm1647 = vweird.f32 %v1640
  %vm1648 = vmor %vm1646, %vm1647
  %v1649 = vsel %vm1648, %v1640, %v1645
  %v1650 = vrsqrt.pop %v1573
  %v1651 = vmul.f32 %v1650, %v1573
  %v1652 = vmul.f32 %v1651, %v1650
  %v1653 = vmul.f32 0.5, %v1652
  %v1654 = vsub.f32 1.5, %v1653
  %v1655 = vmul.f32 %v1650, %v1654
  %vm1656 = vweird.f32 %v1573
  %vm1657 = vweird.f32 %v1650
  %vm1658 = vmor %vm1656, %vm1657
  %v1659 = vsel %vm1658, %v1650, %v1655
  %v1660 = vrsqrt.pop %v1574
  %v1661 = vmul.f32 %v1660, %v1574
  %v1662 = vmul.f32 %v1661, %v1660
  %v1663 = vmul.f32 0.5, %v1662
  %v1664 = vsub.f32 1.5, %v1663
  %v1665 = vmul.f32 %v1660, %v1664
  %vm1666 = vweird.f32 %v1574
  %vm1667 = vweird.f32 %v1660
  %vm1668 = vmor %vm1666, %vm1667
  %v1669 = vsel %vm1668, %v1660, %v1665
  %v1670 = vrsqrt.pop %v1575
  %v1671 = vmul.f32 %v1670, %v1575
  %v1672 = vmul.f32 %v1671, %v1670
  %v1673 = vmul.f32 0.5, %v1672
  %v1674 = vsub.f32 1.5, %v1673
  %v1675 = vmul.f32 %v1670, %v1674
  %vm1676 = vweird.f32 %v1575
  %vm1677 = vweird.f32 %v1670
  %vm1678 = vmor %vm1676, %vm1677
  %v1679 = vsel %vm1678, %v1670, %v1675
  %v1680 = vrsqrt.pop %v1576
  %v1681 = vmul.f32 %v1680, %v1576
  %v1682 = vmul.f32 %v1681, %v1680
  %v1683 = vmul.f32 0.5, %v1682
  %v1684 = vsub.f32 1.5, %v1683
  %v1685 = vmul.f32 %v1680, %v1684
  %vm1686 = vweird.f32 %v1576
  %vm1687 = vweird.f32 %v1680
  %vm1688 = vmor %vm1686, %vm1687
  %v1689 = vsel %vm1688, %v1680, %v1685
  %v1690 = vrsqrt.pop %v1577
  %v1691 = vmul.f32 %v1690, %v1577
  %v1692 = vmul.f32 %v1691, %v1690
  %v1693 = vmul.f32 0.5, %v1692
  %v1694 = vsub.f32 1.5, %v1693
  %v1695 = vmul.f32 %v1690, %v1694
  %vm1696 = vweird.f32 %v1577
  %vm1697 = vweird.f32 %v1690
  %vm1698 = vmor %vm1696, %vm1697
  %v1699 = vsel %vm1698, %v1690, %v1695
  %v1700 = vrsqrt.pop %v1578
  %v1701 = vmul.f32 %v1700, %v1578
  %v1702 = vmul.f32 %v1701, %v1700
  %v1703 = vmul.f32 0.5, %v1702
  %v1704 = vsub.f32 1.5, %v1703
  %v1705 = vmul.f32 %v1700, %v1704
  %vm1706 = vweird.f32 %v1578
  %vm1707 = vweird.f32 %v1700
  %vm1708 = vmor %vm1706, %vm1707
  %v1709 = vsel %vm1708, %v1700, %v1705
  %v1710 = vrsqrt.pop %v1579
  %v1711 = vmul.f32 %v1710, %v1579
  %v1712 = vmul.f32 %v1711, %v1710
  %v1713 = vmul.f32 0.5, %v1712
  %v1714 = vsub.f32 1.5, %v1713
  %v1715 = vmul.f32 %v1710, %v1714
  %vm1716 = vweird.f32 %v1579
  %vm1717 = vweird.f32 %v1710
  %vm1718 = vmor %vm1716, %vm1717
  %v1719 = vsel %vm1718, %v1710, %v1715
  %v1720 = vrsqrt.pop %v1580
  %v1721 = vmul.f32 %v1720, %v1580
  %v1722 = vmul.f32 %v1721, %v1720
  %v1723 = vmul.f32 0.5, %v1722
  %v1724 = vsub.f32 1.5, %v1723
  %v1725 = vmul.f32 %v1720, %v1724
  %vm1726 = vweird.f32 %v1580
  %vm1727 = vweird.f32 %v1720
  %vm1728 = vmor %vm1726, %vm1727
  %v1729 = vsel %vm1728, %v1720, %v1725
  %v1730 = vrsqrt.pop %v1581
  %v1731 = vmul.f32 %v1730, %v1581
  %v1732 = vmul.f32 %v1731, %v1730
  %v1733 = vmul.f32 0.5, %v1732
  %v1734 = vsub.f32 1.5, %v1733
  %v1735 = vmul.f32 %v1730, %v1734
  %vm1736 = vweird.f32 %v1581
  %vm1737 = vweird.f32 %v1730
  %vm1738 = vmor %vm1736, %vm1737
  %v1739 = vsel %vm1738, %v1730, %v1735
  %v1740 = vrsqrt.pop %v1582
  %v1741 = vmul.f32 %v1740, %v1582
  %v1742 = vmul.f32 %v1741, %v1740
  %v1743 = vmul.f32 0.5, %v1742
  %v1744 = vsub.f32 1.5, %v1743
  %v1745 = vmul.f32 %v1740, %v1744
  %vm1746 = vweird.f32 %v1582
  %vm1747 = vweird.f32 %v1740
  %vm1748 = vmor %vm1746, %vm1747
  %v1749 = vsel %vm1748, %v1740, %v1745
  %v1750 = vrsqrt.pop %v1583
  %v1751 = vmul.f32 %v1750, %v1583
  %v1752 = vmul.f32 %v1751, %v1750
  %v1753 = vmul.f32 0.5, %v1752
  %v1754 = vsub.f32 1.5, %v1753
  %v1755 = vmul.f32 %v1750, %v1754
  %vm1756 = vweird.f32 %v1583
  %vm1757 = vweird.f32 %v1750
  %vm1758 = vmor %vm1756, %vm1757
  %v1759 = vsel %vm1758, %v1750, %v1755
  %v1760 = vrsqrt.pop %v1584
  %v1761 = vmul.f32 %v1760, %v1584
  %v1762 = vmul.f32 %v1761, %v1760
  %v1763 = vmul.f32 0.5, %v1762
  %v1764 = vsub.f32 1.5, %v1763
  %v1765 = vmul.f32 %v1760, %v1764
  %vm1766 = vweird.f32 %v1584
  %vm1767 = vweird.f32 %v1760
  %vm1768 = vmor %vm1766, %vm1767
  %v1769 = vsel %vm1768, %v1760, %v1765
  %v1770 = vrsqrt.pop %v1585
  %v1771 = vmul.f32 %v1770, %v1585
  %v1772 = vmul.f32 %v1771, %v1770
  %v1773 = vmul.f32 0.5, %v1772
  %v1774 = vsub.f32 1.5, %v1773
  %v1775 = vmul.f32 %v1770, %v1774
  %vm1776 = vweird.f32 %v1585
  %vm1777 = vweird.f32 %v1770
  %vm1778 = vmor %vm1776, %vm1777
  %v1779 = vsel %vm1778, %v1770, %v1775
  %v1780 = vrsqrt.pop %v1586
  %v1781 = vmul.f32 %v1780, %v1586
  %v1782 = vmul.f32 %v1781, %v1780
  %v1783 = vmul.f32 0.5, %v1782
  %v1784 = vsub.f32 1.5, %v1783
  %v1785 = vmul.f32 %v1780, %v1784
  %vm1786 = vweird.f32 %v1586
  %vm1787 = vweird.f32 %v1780
  %vm1788 = vmor %vm1786, %vm1787
  %v1789 = vsel %vm1788, %v1780, %v1785
  %v1790 = vrsqrt.pop %v1587
  %v1791 = vmul.f32 %v1790, %v1587
  %v1792 = vmul.f32 %v1791, %v1790
  %v1793 = vmul.f32 0.5, %v1792
  %v1794 = vsub.f32 1.5, %v1793
  %v1795 = vmul.f32 %v1790, %v1794
  %vm1796 = vweird.f32 %v1587
  %vm1797 = vweird.f32 %v1790
  %vm1798 = vmor %vm1796, %vm1797
  %v1799 = vsel %vm1798, %v1790, %v1795
  %v1800 = vrsqrt.pop %v1588
  %v1801 = vmul.f32 %v1800, %v1588
  %v1802 = vmul.f32 %v1801, %v1800
  %v1803 = vmul.f32 0.5, %v1802
  %v1804 = vsub.f32 1.5, %v1803
  %v1805 = vmul.f32 %v1800, %v1804
  %vm1806 = vweird.f32 %v1588
  %vm1807 = vweird.f32 %v1800
  %vm1808 = vmor %vm1806, %vm1807
  %v1809 = vsel %vm1808, %v1800, %v1805
  %v1810 = vrsqrt.pop %v1589
  %v1811 = vmul.f32 %v1810, %v1589
  %v1812 = vmul.f32 %v1811, %v1810
  %v1813 = vmul.f32 0.5, %v1812
  %v1814 = vsub.f32 1.5, %v1813
  %v1815 = vmul.f32 %v1810, %v1814
  %vm1816 = vweird.f32 %v1589
  %vm1817 = vweird.f32 %v1810
  %vm1818 = vmor %vm1816, %vm1817
  %v1819 = vsel %vm1818, %v1810, %v1815
  %v1820 = vrsqrt.pop %v1590
  %v1821 = vmul.f32 %v1820, %v1590
  %v1822 = vmul.f32 %v1821, %v1820
  %v1823 = vmul.f32 0.5, %v1822
  %v1824 = vsub.f32 1.5, %v1823
  %v1825 = vmul.f32 %v1820, %v1824
  %vm1826 = vweird.f32 %v1590
  %vm1827 = vweird.f32 %v1820
  %vm1828 = vmor %vm1826, %vm1827
  %v1829 = vsel %vm1828, %v1820, %v1825
  %v1830 = vrsqrt.pop %v1591
  %v1831 = vmul.f32 %v1830, %v1591
  %v1832 = vmul.f32 %v1831, %v1830
  %v1833 = vmul.f32 0.5, %v1832
  %v1834 = vsub.f32 1.5, %v1833
  %v1835 = vmul.f32 %v1830, %v1834
  %vm1836 = vweird.f32 %v1591
  %vm1837 = vweird.f32 %v1830
  %vm1838 = vmor %vm1836, %vm1837
  %v1839 = vsel %vm1838, %v1830, %v1835
  %v1840 = vrsqrt.pop %v1592
  %v1841 = vmul.f32 %v1840, %v1592
  %v1842 = vmul.f32 %v1841, %v1840
  %v1843 = vmul.f32 0.5, %v1842
  %v1844 = vsub.f32 1.5, %v1843
  %v1845 = vmul.f32 %v1840, %v1844
  %vm1846 = vweird.f32 %v1592
  %vm1847 = vweird.f32 %v1840
  %vm1848 = vmor %vm1846, %vm1847
  %v1849 = vsel %vm1848, %v1840, %v1845
  %v1850 = vrsqrt.pop %v1593
  %v1851 = vmul.f32 %v1850, %v1593
  %v1852 = vmul.f32 %v1851, %v1850
  %v1853 = vmul.f32 0.5, %v1852
  %v1854 = vsub.f32 1.5, %v1853
  %v1855 = vmul.f32 %v1850, %v1854
  %vm1856 = vweird.f32 %v1593
  %vm1857 = vweird.f32 %v1850
  %vm1858 = vmor %vm1856, %vm1857
  %v1859 = vsel %vm1858, %v1850, %v1855
  %v1860 = vrsqrt.pop %v1594
  %v1861 = vmul.f32 %v1860, %v1594
  %v1862 = vmul.f32 %v1861, %v1860
  %v1863 = vmul.f32 0.5, %v1862
  %v1864 = vsub.f32 1.5, %v1863
  %v1865 = vmul.f32 %v1860, %v1864
  %vm1866 = vweird.f32 %v1594
  %vm1867 = vweird.f32 %v1860
  %vm1868 = vmor %vm1866, %vm1867
  %v1869 = vsel %vm1868, %v1860, %v1865
  %v1870 = vrsqrt.pop %v1595
  %v1871 = vmul.f32 %v1870, %v1595
  %v1872 = vmul.f32 %v1871, %v1870
  %v1873 = vmul.f32 0.5, %v1872
  %v1874 = vsub.f32 1.5, %v1873
  %v1875 = vmul.f32 %v1870, %v1874
  %vm1876 = vweird.f32 %v1595
  %vm1877 = vweird.f32 %v1870
  %vm1878 = vmor %vm1876, %vm1877
  %v1879 = vsel %vm1878, %v1870, %v1875
  %v1880 = vrsqrt.pop %v1596
  %v1881 = vmul.f32 %v1880, %v1596
  %v1882 = vmul.f32 %v1881, %v1880
  %v1883 = vmul.f32 0.5, %v1882
  %v1884 = vsub.f32 1.5, %v1883
  %v1885 = vmul.f32 %v1880, %v1884
  %vm1886 = vweird.f32 %v1596
  %vm1887 = vweird.f32 %v1880
  %vm1888 = vmor %vm1886, %vm1887
  %v1889 = vsel %vm1888, %v1880, %v1885
  %v1890 = vrsqrt.pop %v1597
  %v1891 = vmul.f32 %v1890, %v1597
  %v1892 = vmul.f32 %v1891, %v1890
  %v1893 = vmul.f32 0.5, %v1892
  %v1894 = vsub.f32 1.5, %v1893
  %v1895 = vmul.f32 %v1890, %v1894
  %vm1896 = vweird.f32 %v1597
  %vm1897 = vweird.f32 %v1890
  %vm1898 = vmor %vm1896, %vm1897
  %v1899 = vsel %vm1898, %v1890, %v1895
  %v1900 = vrsqrt.pop %v1598
  %v1901 = vmul.f32 %v1900, %v1598
  %v1902 = vmul.f32 %v1901, %v1900
  %v1903 = vmul.f32 0.5, %v1902
  %v1904 = vsub.f32 1.5, %v1903
  %v1905 = vmul.f32 %v1900, %v1904
  %vm1906 = vweird.f32 %v1598
  %vm1907 = vweird.f32 %v1900
  %vm1908 = vmor %vm1906, %vm1907
  %v1909 = vsel %vm1908, %v1900, %v1905
  %v1910 = vrsqrt.pop %v1599
  %v1911 = vmul.f32 %v1910, %v1599
  %v1912 = vmul.f32 %v1911, %v1910
  %v1913 = vmul.f32 0.5, %v1912
  %v1914 = vsub.f32 1.5, %v1913
  %v1915 = vmul.f32 %v1910, %v1914
  %vm1916 = vweird.f32 %v1599
  %vm1917 = vweird.f32 %v1910
  %vm1918 = vmor %vm1916, %vm1917
  %v1919 = vsel %vm1918, %v1910, %v1915
  %v1920 = vsub.f32 %v1609, 1.0
  %v1921 = vsub.f32 %v1619, 1.0
  %v1922 = vsub.f32 %v1629, 1.0
  %v1923 = vsub.f32 %v1639, 1.0
  %v1924 = vsub.f32 %v1649, 1.0
  %v1925 = vsub.f32 %v1659, 1.0
  %v1926 = vsub.f32 %v1669, 1.0
  %v1927 = vsub.f32 %v1679, 1.0
  %v1928 = vsub.f32 %v1689, 1.0
  %v1929 = vsub.f32 %v1699, 1.0
  %v1930 = vsub.f32 %v1709, 1.0
  %v1931 = vsub.f32 %v1719, 1.0
  %v1932 = vsub.f32 %v1729, 1.0
  %v1933 = vsub.f32 %v1739, 1.0
  %v1934 = vsub.f32 %v1749, 1.0
  %v1935 = vsub.f32 %v1759, 1.0
  %v1936 = vsub.f32 %v1769, 1.0
  %v1937 = vsub.f32 %v1779, 1.0
  %v1938 = vsub.f32 %v1789, 1.0
  %v1939 = vsub.f32 %v1799, 1.0
  %v1940 = vsub.f32 %v1809, 1.0
  %v1941 = vsub.f32 %v1819, 1.0
  %v1942 = vsub.f32 %v1829, 1.0
  %v1943 = vsub.f32 %v1839, 1.0
  %v1944 = vsub.f32 %v1849, 1.0
  %v1945 = vsub.f32 %v1859, 1.0
  %v1946 = vsub.f32 %v1869, 1.0
  %v1947 = vsub.f32 %v1879, 1.0
  %v1948 = vsub.f32 %v1889, 1.0
  %v1949 = vsub.f32 %v1899, 1.0
  %v1950 = vsub.f32 %v1909, 1.0
  %v1951 = vsub.f32 %v1919, 1.0
  %v1952 = vmul.f32 %v1471, %v1920
  %v1953 = vmul.f32 %v1471, %v1921
  %v1954 = vmul.f32 %v1471, %v1922
  %v1955 = vmul.f32 %v1471, %v1923
  %v1956 = vmul.f32 %v1471, %v1924
  %v1957 = vmul.f32 %v1471, %v1925
  %v1958 = vmul.f32 %v1471, %v1926
  %v1959 = vmul.f32 %v1471, %v1927
  %v1960 = vmul.f32 %v1471, %v1928
  %v1961 = vmul.f32 %v1471, %v1929
  %v1962 = vmul.f32 %v1471, %v1930
  %v1963 = vmul.f32 %v1471, %v1931
  %v1964 = vmul.f32 %v1471, %v1932
  %v1965 = vmul.f32 %v1471, %v1933
  %v1966 = vmul.f32 %v1471, %v1934
  %v1967 = vmul.f32 %v1471, %v1935
  %v1968 = vmul.f32 %v1471, %v1936
  %v1969 = vmul.f32 %v1471, %v1937
  %v1970 = vmul.f32 %v1471, %v1938
  %v1971 = vmul.f32 %v1471, %v1939
  %v1972 = vmul.f32 %v1471, %v1940
  %v1973 = vmul.f32 %v1471, %v1941
  %v1974 = vmul.f32 %v1471, %v1942
  %v1975 = vmul.f32 %v1471, %v1943
  %v1976 = vmul.f32 %v1471, %v1944
  %v1977 = vmul.f32 %v1471, %v1945
  %v1978 = vmul.f32 %v1471, %v1946
  %v1979 = vmul.f32 %v1471, %v1947
  %v1980 = vmul.f32 %v1471, %v1948
  %v1981 = vmul.f32 %v1471, %v1949
  %v1982 = vmul.f32 %v1471, %v1950
  %v1983 = vmul.f32 %v1471, %v1951
  %v1984 = vadd.f32 %v1952, 1.0
  %v1985 = vadd.f32 %v1953, 1.0
  %v1986 = vadd.f32 %v1954, 1.0
  %v1987 = vadd.f32 %v1955, 1.0
  %v1988 = vadd.f32 %v1956, 1.0
  %v1989 = vadd.f32 %v1957, 1.0
  %v1990 = vadd.f32 %v1958, 1.0
  %v1991 = vadd.f32 %v1959, 1.0
  %v1992 = vadd.f32 %v1960, 1.0
  %v1993 = vadd.f32 %v1961, 1.0
  %v1994 = vadd.f32 %v1962, 1.0
  %v1995 = vadd.f32 %v1963, 1.0
  %v1996 = vadd.f32 %v1964, 1.0
  %v1997 = vadd.f32 %v1965, 1.0
  %v1998 = vadd.f32 %v1966, 1.0
  %v1999 = vadd.f32 %v1967, 1.0
  %v2000 = vadd.f32 %v1968, 1.0
  %v2001 = vadd.f32 %v1969, 1.0
  %v2002 = vadd.f32 %v1970, 1.0
  %v2003 = vadd.f32 %v1971, 1.0
  %v2004 = vadd.f32 %v1972, 1.0
  %v2005 = vadd.f32 %v1973, 1.0
  %v2006 = vadd.f32 %v1974, 1.0
  %v2007 = vadd.f32 %v1975, 1.0
  %v2008 = vadd.f32 %v1976, 1.0
  %v2009 = vadd.f32 %v1977, 1.0
  %v2010 = vadd.f32 %v1978, 1.0
  %v2011 = vadd.f32 %v1979, 1.0
  %v2012 = vadd.f32 %v1980, 1.0
  %v2013 = vadd.f32 %v1981, 1.0
  %v2014 = vadd.f32 %v1982, 1.0
  %v2015 = vadd.f32 %v1983, 1.0
  %v2016 = vmul.f32 %v1407, %v1984
  %v2017 = vmul.f32 %v1408, %v1985
  %v2018 = vmul.f32 %v1409, %v1986
  %v2019 = vmul.f32 %v1410, %v1987
  %v2020 = vmul.f32 %v1411, %v1988
  %v2021 = vmul.f32 %v1412, %v1989
  %v2022 = vmul.f32 %v1413, %v1990
  %v2023 = vmul.f32 %v1414, %v1991
  %v2024 = vmul.f32 %v1415, %v1992
  %v2025 = vmul.f32 %v1416, %v1993
  %v2026 = vmul.f32 %v1417, %v1994
  %v2027 = vmul.f32 %v1418, %v1995
  %v2028 = vmul.f32 %v1419, %v1996
  %v2029 = vmul.f32 %v1420, %v1997
  %v2030 = vmul.f32 %v1421, %v1998
  %v2031 = vmul.f32 %v1422, %v1999
  %v2032 = vmul.f32 %v1423, %v2000
  %v2033 = vmul.f32 %v1424, %v2001
  %v2034 = vmul.f32 %v1425, %v2002
  %v2035 = vmul.f32 %v1426, %v2003
  %v2036 = vmul.f32 %v1427, %v2004
  %v2037 = vmul.f32 %v1428, %v2005
  %v2038 = vmul.f32 %v1429, %v2006
  %v2039 = vmul.f32 %v1430, %v2007
  %v2040 = vmul.f32 %v1431, %v2008
  %v2041 = vmul.f32 %v1432, %v2009
  %v2042 = vmul.f32 %v1433, %v2010
  %v2043 = vmul.f32 %v1434, %v2011
  %v2044 = vmul.f32 %v1435, %v2012
  %v2045 = vmul.f32 %v1436, %v2013
  %v2046 = vmul.f32 %v1437, %v2014
  %v2047 = vmul.f32 %v1438, %v2015
  %v2048 = vpack.c.bf16 %v2016, %v2016
  %v2049 = vpack.c.bf16 %v2017, %v2017
  %v2050 = vpack.c.bf16 %v2018, %v2018
  %v2051 = vpack.c.bf16 %v2019, %v2019
  %v2052 = vpack.c.bf16 %v2020, %v2020
  %v2053 = vpack.c.bf16 %v2021, %v2021
  %v2054 = vpack.c.bf16 %v2022, %v2022
  %v2055 = vpack.c.bf16 %v2023, %v2023
  %v2056 = vpack.c.bf16 %v2024, %v2024
  %v2057 = vpack.c.bf16 %v2025, %v2025
  %v2058 = vpack.c.bf16 %v2026, %v2026
  %v2059 = vpack.c.bf16 %v2027, %v2027
  %v2060 = vpack.c.bf16 %v2028, %v2028
  %v2061 = vpack.c.bf16 %v2029, %v2029
  %v2062 = vpack.c.bf16 %v2030, %v2030
  %v2063 = vpack.c.bf16 %v2031, %v2031
  %v2064 = vpack.c.bf16 %v2032, %v2032
  %v2065 = vpack.c.bf16 %v2033, %v2033
  %v2066 = vpack.c.bf16 %v2034, %v2034
  %v2067 = vpack.c.bf16 %v2035, %v2035
  %v2068 = vpack.c.bf16 %v2036, %v2036
  %v2069 = vpack.c.bf16 %v2037, %v2037
  %v2070 = vpack.c.bf16 %v2038, %v2038
  %v2071 = vpack.c.bf16 %v2039, %v2039
  %v2072 = vpack.c.bf16 %v2040, %v2040
  %v2073 = vpack.c.bf16 %v2041, %v2041
  %v2074 = vpack.c.bf16 %v2042, %v2042
  %v2075 = vpack.c.bf16 %v2043, %v2043
  %v2076 = vpack.c.bf16 %v2044, %v2044
  %v2077 = vpack.c.bf16 %v2045, %v2045
  %v2078 = vpack.c.bf16 %v2046, %v2046
  %v2079 = vpack.c.bf16 %v2047, %v2047
  %2080 = vst [vmem:[%s7] sm:$0xf] %v2048
  %2081 = vst [vmem:[%s7 + $0x4] sm:$0xf] %v2049
  %2082 = vst [vmem:[%s7 + $0x8] sm:$0xf] %v2050
  %2083 = vst [vmem:[%s7 + $0xc] sm:$0xf] %v2051
  %2084 = vst [vmem:[%s7 + $0x10] sm:$0xf] %v2052
  %2085 = vst [vmem:[%s7 + $0x14] sm:$0xf] %v2053
  %2086 = vst [vmem:[%s7 + $0x18] sm:$0xf] %v2054
  %2087 = vst [vmem:[%s7 + $0x1c] sm:$0xf] %v2055
  %2088 = vst [vmem:[%s7 + $0x20] sm:$0xf] %v2056
  %2089 = vst [vmem:[%s7 + $0x24] sm:$0xf] %v2057
  %2090 = vst [vmem:[%s7 + $0x28] sm:$0xf] %v2058
  %2091 = vst [vmem:[%s7 + $0x2c] sm:$0xf] %v2059
  %2092 = vst [vmem:[%s7 + $0x30] sm:$0xf] %v2060
  %2093 = vst [vmem:[%s7 + $0x34] sm:$0xf] %v2061
  %2094 = vst [vmem:[%s7 + $0x38] sm:$0xf] %v2062
  %2095 = vst [vmem:[%s7 + $0x3c] sm:$0xf] %v2063
  %2096 = vst [vmem:[%s7 + $0x40] sm:$0xf] %v2064
  %2097 = vst [vmem:[%s7 + $0x44] sm:$0xf] %v2065
  %2098 = vst [vmem:[%s7 + $0x48] sm:$0xf] %v2066
  %2099 = vst [vmem:[%s7 + $0x4c] sm:$0xf] %v2067
  %2100 = vst [vmem:[%s7 + $0x50] sm:$0xf] %v2068
  %2101 = vst [vmem:[%s7 + $0x54] sm:$0xf] %v2069
  %2102 = vst [vmem:[%s7 + $0x58] sm:$0xf] %v2070
  %2103 = vst [vmem:[%s7 + $0x5c] sm:$0xf] %v2071
  %2104 = vst [vmem:[%s7 + $0x60] sm:$0xf] %v2072
  %2105 = vst [vmem:[%s7 + $0x64] sm:$0xf] %v2073
  %2106 = vst [vmem:[%s7 + $0x68] sm:$0xf] %v2074
  %2107 = vst [vmem:[%s7 + $0x6c] sm:$0xf] %v2075
  %2108 = vst [vmem:[%s7 + $0x70] sm:$0xf] %v2076
  %2109 = vst [vmem:[%s7 + $0x74] sm:$0xf] %v2077
  %2110 = vst [vmem:[%s7 + $0x78] sm:$0xf] %v2078
  %2111 = vst [vmem:[%s7 + $0x7c] sm:$0xf] %v2079
  // Predicated region
  $region30: #{_point_pipeline.1} parent=0 // pred_check
    _
  $region31: #{_point_pipeline.1} parent=0 // pred_check_branch
    %2113 = sbr.rel (0) target = $region33
  $region32: #{_point_pipeline.1} parent=0 // pred_region
    _
  $region33: #{_point_pipeline.1} parent=0 // pred_fallthru
    _
  // Predicated region
  $region34: #{_point_pipeline.1} parent=0 // pred_check
    _
  $region35: #{_point_pipeline.1} parent=0 // pred_check_branch
    %2115 = sbr.rel (0) target = $region37
  $region36: #{_point_pipeline.1} parent=0 // pred_region
    _
  $region37: #{_point_pipeline.1} parent=0 // pred_fallthru
    _

</llo_original>
